<compile_context>
chip_gen: v5e
topology: v5e:2x2
jax: 0.10.0
libtpu: 0.0.40
codegen_flags: <defaults>
</compile_context>

<pallas_src>
import jax
import jax.numpy as jnp
from jax import lax
from jax.experimental import pallas as pl
from jax.experimental.pallas import tpu as pltpu

# architecture constants (from the torch module __init__)
C1, K1 = 10, 15          # conv1: 1 -> 10, kernel (1, 15), padding 0
C2 = 20                  # conv2: 10 -> 20, kernel (ch, 1), no bias
PK, PS = 20, 2           # avg pool: kernel (1, 20), stride (1, 2)
C3, K3, S3 = 10, 12, 4   # conv3: 20 -> 10, kernel (1, 12), stride (1, 4)
BN_EPS = 1e-5
PAD = 8                  # homogeneous-coordinate rows (sublane-aligned)


def _kernel(x_ref, a1_ref, a2_ref, o_ref):
    # x_ref : (Kin, b_blk)   a1_ref : (M1, Kin)   a2_ref : (M2p, M1)   o_ref : (M2p, b_blk)
    h = jnp.maximum(
        jnp.dot(a1_ref[...], x_ref[...], preferred_element_type=jnp.float32), 0.0)
    o_ref[...] = jnp.dot(a2_ref[...], h, preferred_element_type=jnp.float32)


def _pick_b_blk(B):
    # lane-dense batch block: multiple of 128; bigger blocks amortise the
    # ~0.35us/grid-step overhead, capped at 512 to bound VMEM + padding waste.
    if B <= 128:
        return 128
    return min(512, ((B + 127) // 128) * 128)


def backbone_forward(x, params, *, b_blk=None):
    B, ch, T = x.shape
    L1 = T - (K1 - 1)
    Wp = (L1 - PK) // PS + 1
    W3 = (Wp - K3) // S3 + 1
    f32 = jnp.float32
    if b_blk is None:
        b_blk = _pick_b_blk(B)

    w1, b1, w2 = params["w1"], params["b1"], params["w2"]
    gamma, beta = params["gamma"], params["beta"]
    rmean, rvar = params["running_mean"], params["running_var"]
    w3, b3 = params["w3"], params["b3"]

    # ---- fold conv1 + conv2 + batchnorm (inference running stats) into one operator ----
    # TODO(synk): training-mode BatchNorm (batch statistics) not folded; inference stats used.
    inv_std = 1.0 / jnp.sqrt(rvar.astype(f32) + BN_EPS)
    scale = (gamma * inv_std).astype(f32)                     # (C2,)
    shift = (beta - rmean * gamma * inv_std).astype(f32)      # (C2,)
    # wc[c2, c, k] = scale[c2] * sum_c1 w2[c2, c1, c] * w1[c1, k]
    wc = jnp.einsum("oic,ik->ock", w2.astype(f32), w1.astype(f32)) * scale[:, None, None]
    # A1[(c2, t), (c, tau)] = wc[c2, c, tau - t] for 0 <= tau - t < K1
    kk = jnp.arange(T)[None, :] - jnp.arange(L1)[:, None]     # (L1, T)
    valid = ((kk >= 0) & (kk < K1)).astype(f32)
    a1 = wc[:, :, jnp.clip(kk, 0, K1 - 1)] * valid[None, None]        # (C2, ch, L1, T)
    a1 = jnp.transpose(a1, (0, 2, 1, 3)).reshape(C2 * L1, ch * T)
    # bias: conv1 bias pushed through conv2, BN scale/shift folded
    bias1 = scale * jnp.einsum("oic,i->o", w2.astype(f32), b1.astype(f32)) + shift  # (C2,)
    bias1 = jnp.broadcast_to(bias1[:, None], (C2, L1)).reshape(C2 * L1)

    # ---- fold avgpool + conv3 (+ bias) into a second dense operator ----
    tt = jnp.arange(L1)[:, None]
    jj = jnp.arange(Wp)[None, :]
    pool = (((tt >= PS * jj) & (tt < PS * jj + PK)).astype(f32)) / float(PK)  # (L1, Wp)
    sel = S3 * jnp.arange(W3)[:, None] + jnp.arange(K3)[None, :]              # (W3, K3)
    psel = pool[:, sel]                                                       # (L1, W3, K3)
    a2 = jnp.einsum("ock,tmk->omct", w3.astype(f32), psel).reshape(C3 * W3, C2 * L1)
    bias2 = jnp.broadcast_to(b3.astype(f32)[:, None], (C3, W3)).reshape(C3 * W3)

    # ---- homogeneous-coordinate augmentation: fold biases into the operators ----
    Kin = ch * T + PAD                    # extra "ones" rows on the input
    M1 = C2 * L1 + PAD                    # extra "ones" rows in the hidden slab
    M2 = C3 * W3
    M2p = ((M2 + 7) // 8) * 8             # pad output rows to a sublane multiple
    a1f = jnp.zeros((M1, Kin), f32)
    a1f = a1f.at[:C2 * L1, :ch * T].set(a1)
    a1f = a1f.at[:C2 * L1, ch * T].set(bias1)     # bias1 * (ones row of X)
    a1f = a1f.at[C2 * L1, ch * T].set(1.0)        # hidden ones row: relu(1) = 1
    a2f = jnp.zeros((M2p, M1), f32)
    a2f = a2f.at[:M2, :C2 * L1].set(a2)
    a2f = a2f.at[:M2, C2 * L1].set(bias2)         # bias2 * (hidden ones row)

    # ---- batch on the lane axis, blocked by b_blk (lane-dense, unmasked stores) ----
    nb = pl.cdiv(B, b_blk)
    B_pad = nb * b_blk
    X = jnp.zeros((Kin, B_pad), f32)
    X = X.at[:ch * T, :B].set(jnp.transpose(x.reshape(B, ch * T).astype(f32)))
    X = X.at[ch * T, :].set(1.0)

    # explicit VMEM budget (2x margin): operators + hidden slab + double-buffered x/out blocks
    est = 4 * (a1f.size + a2f.size + M1 * b_blk + 2 * (Kin + M2p) * b_blk)
    vmem_limit = int(min(128 * 2 ** 20, max(32 * 2 ** 20, 2 * est)))

    # dropout: identity (inference)
    # TODO(synk): training-mode stochastic dropout (F.dropout default training=True)

    out = pl.pallas_call(
        _kernel,
        out_shape=jax.ShapeDtypeStruct((M2p, B_pad), f32),
        grid=(nb,),
        in_specs=[
            pl.BlockSpec((Kin, b_blk), lambda b: (0, b)),
            pl.BlockSpec((M1, Kin), lambda b: (0, 0)),
            pl.BlockSpec((M2p, M1), lambda b: (0, 0)),
        ],
        out_specs=pl.BlockSpec((M2p, b_blk), lambda b: (0, b)),
        compiler_params=pltpu.CompilerParams(
            dimension_semantics=("parallel",),
            vmem_limit_bytes=vmem_limit,
        ),
    )(X, a1f, a2f)

    # rows are ordered (c3, w3) c3-major, matching torch's reshape of (B, C3, 1, W3)
    return jnp.transpose(out[:M2, :B])            # (B, C3*W3)


def reference_forward(x, params):
    """Pure-JAX reference (inference semantics), independent formulation."""
    w1, b1, w2 = params["w1"], params["b1"], params["w2"]
    gamma, beta = params["gamma"], params["beta"]
    rmean, rvar = params["running_mean"], params["running_var"]
    w3, b3 = params["w3"], params["b3"]
    B = x.shape[0]
    dn = ("NCHW", "OIHW", "NCHW")
    hp = lax.Precision.HIGHEST
    y = x[:, None, :, :]                                               # (B,1,ch,T)
    y = lax.conv_general_dilated(y, w1[:, None, None, :], (1, 1), "VALID",
                                 dimension_numbers=dn, precision=hp)
    y = y + b1[None, :, None, None]
    y = lax.conv_general_dilated(y, w2[:, :, :, None], (1, 1), "VALID",
                                 dimension_numbers=dn, precision=hp)
    y = (y - rmean[None, :, None, None]) / jnp.sqrt(rvar[None, :, None, None] + BN_EPS)
    y = y * gamma[None, :, None, None] + beta[None, :, None, None]
    y = jnp.maximum(y, 0.0)
    y = lax.reduce_window(y, 0.0, lax.add, (1, 1, 1, PK), (1, 1, 1, PS), "VALID") / PK
    y = lax.conv_general_dilated(y, w3[:, :, None, :], (1, S3), "VALID",
                                 dimension_numbers=dn, precision=hp)
    y = y + b3[None, :, None, None]
    return y.reshape(B, -1)


if __name__ == "__main__":
    B, ch, T = 2, 4, 64          # small shapes: batch=2, EEG channels=4, time=64
    key = jax.random.PRNGKey(0)
    ks = jax.random.split(key, 8)
    params = {
        "w1": 0.1 * jax.random.normal(ks[0], (C1, K1), jnp.float32),
        "b1": 0.1 * jax.random.normal(ks[1], (C1,), jnp.float32),
        "w2": 0.1 * jax.random.normal(ks[2], (C2, C1, ch), jnp.float32),
        "gamma": 1.0 + 0.1 * jax.random.normal(ks[3], (C2,), jnp.float32),
        "beta": 0.1 * jax.random.normal(ks[4], (C2,), jnp.float32),
        "running_mean": jnp.zeros((C2,), jnp.float32),
        "running_var": jnp.ones((C2,), jnp.float32),
        "w3": 0.1 * jax.random.normal(ks[5], (C3, C2, K3), jnp.float32),
        "b3": 0.1 * jax.random.normal(ks[6], (C3,), jnp.float32),
    }
    x = jax.random.normal(ks[7], (B, ch, T), jnp.float32)

    out = jax.block_until_ready(backbone_forward(x, params))
    ref = reference_forward(x, params)

    assert out.shape == ref.shape, (out.shape, ref.shape)
    if not bool(jnp.allclose(out, ref, rtol=5e-2, atol=1e-2)):
        raise AssertionError(
            f"mismatch: max abs err {float(jnp.max(jnp.abs(out - ref)))}")
    print("KERNEL_OK")
</pallas_src>

<mosaic_0001>
module attributes {stable_mosaic.version = 11 : i64} {
  func.func @_kernel(%arg0: i32, %arg1: memref<264x128xf32, #tpu.memory_space<vmem>>, %arg2: memref<1008x264xf32, #tpu.memory_space<vmem>>, %arg3: memref<24x1008xf32, #tpu.memory_space<vmem>>, %arg4: memref<24x128xf32, #tpu.memory_space<vmem>>) attributes {dimension_semantics = [#tpu.dimension_semantics<parallel>], iteration_bounds = array<i64: 1>, scalar_prefetch = 0 : i64, scratch_operands = 0 : i64, tpu.core_type = #tpu.core_type<tc>, window_params = [{transform_indices = @transform_0, window_bounds = array<i64: 264, 128>}, {pipeline_mode = #tpu.pipeline_mode<synchronous>, transform_indices = @transform_1, window_bounds = array<i64: 1008, 264>}, {pipeline_mode = #tpu.pipeline_mode<synchronous>, transform_indices = @transform_2, window_bounds = array<i64: 24, 1008>}, {transform_indices = @transform_3, window_bounds = array<i64: 24, 128>}]} {
    %c0 = arith.constant 0 : index
    %c0_0 = arith.constant 0 : index
    %0 = vector.load %arg2[%c0, %c0_0] : memref<1008x264xf32, #tpu.memory_space<vmem>>, vector<1008x264xf32>
    %c0_1 = arith.constant 0 : index
    %c0_2 = arith.constant 0 : index
    %1 = vector.load %arg1[%c0_1, %c0_2] : memref<264x128xf32, #tpu.memory_space<vmem>>, vector<264x128xf32>
    %cst = arith.constant dense<0.000000e+00> : vector<1008x128xf32>
    %2 = tpu.matmul %0, %1, %cst {dimension_numbers = #tpu.dot_dimension_numbers<[1], [0], [0], [1], [0, 0, 1, 1], [], []>} : vector<1008x264xf32>, vector<264x128xf32>, vector<1008x128xf32> -> vector<1008x128xf32>
    %cst_3 = arith.constant 0.000000e+00 : f32
    %3 = vector.broadcast %cst_3 : f32 to vector<1008x128xf32>
    %4 = arith.maximumf %2, %3 : vector<1008x128xf32>
    %c0_4 = arith.constant 0 : index
    %c0_5 = arith.constant 0 : index
    %5 = vector.load %arg3[%c0_4, %c0_5] : memref<24x1008xf32, #tpu.memory_space<vmem>>, vector<24x1008xf32>
    %cst_6 = arith.constant dense<0.000000e+00> : vector<24x128xf32>
    %6 = tpu.matmul %5, %4, %cst_6 {dimension_numbers = #tpu.dot_dimension_numbers<[1], [0], [0], [1], [0, 0, 1, 1], [], []>} : vector<24x1008xf32>, vector<1008x128xf32>, vector<24x128xf32> -> vector<24x128xf32>
    %c0_7 = arith.constant 0 : index
    %c0_8 = arith.constant 0 : index
    %7 = vector.load %arg4[%c0_7, %c0_8] : memref<24x128xf32, #tpu.memory_space<vmem>>, vector<24x128xf32>
    tpu.vector_store %arg4[%c0_7, %c0_8], %6 {strides = array<i32>} : memref<24x128xf32, #tpu.memory_space<vmem>>, vector<24x128xf32>,
    return
  }
  func.func @transform_0(%arg0: i32) -> (i32, i32) {
    %c0_i32 = arith.constant 0 : i32
    %c0_i32_0 = arith.constant 0 : i32
    return %c0_i32, %arg0 : i32, i32
  }
  func.func @transform_1(%arg0: i32) -> (i32, i32) {
    %c0_i32 = arith.constant 0 : i32
    %c0_i32_0 = arith.constant 0 : i32
    %c0_i32_1 = arith.constant 0 : i32
    return %c0_i32, %c0_i32_0 : i32, i32
  }
  func.func @transform_2(%arg0: i32) -> (i32, i32) {
    %c0_i32 = arith.constant 0 : i32
    %c0_i32_0 = arith.constant 0 : i32
    %c0_i32_1 = arith.constant 0 : i32
    return %c0_i32, %c0_i32_0 : i32, i32
  }
  func.func @transform_3(%arg0: i32) -> (i32, i32) {
    %c0_i32 = arith.constant 0 : i32
    %c0_i32_0 = arith.constant 0 : i32
    return %c0_i32, %arg0 : i32, i32
  }
}

</mosaic_0001>

<llo_original>
// kernel: tpu_custom_call.1
$region0: #{tpu_custom_call.1}
  #allocation0 [shape = 'u32[]', space=smem, size = 0x4, offset = 0x4, fixed_abs, tag = 'smem constant byte address 0x4 - core index']
  #allocation1 [shape = 'u32[72,128]{1,0:T(1,128)}', space=vmem, size = 0x9000, scoped, tag = 'internal scratch']
  %s0 = inlined_call_operand.vmem [shape: f32[264,128], index: 0, kind: input, shape index: {}]
  %s1 = inlined_call_operand.vmem [shape: f32[1008,264], index: 1, kind: input, shape index: {}]
  %s2 = inlined_call_operand.vmem [shape: f32[24,1008], index: 2, kind: input, shape index: {}]
  %s3 = inlined_call_operand.hbm [shape: f32[24,128], index: 3, kind: output, shape index: {}]
  %s4 = sld [smem:[#allocation0]]
  $region22: #{tpu_custom_call.1} parent=0
    _
  %s6 = ssub.s32 1, %s4
  %s7 = scalar_select 0, %s6, %s4
  $region1: #{tpu_custom_call.1} parent=0
    #allocation2 [shape = 'u8[12288]{0}', space=vmem, size = 0x3000, scoped, tag = 'output window, operand 0, single buffered']
    #allocation3 [shape = 's32[1]{0}', space=sflag, size = 0x4, scoped, tag = 'scoped memory for tpu_custom_call.1']
    %8 = vsyncpa [#allocation3], 0
    // Predicated region
    $region2: #{tpu_custom_call.1} parent=1 // pred_check
      _
    $region3: #{tpu_custom_call.1} parent=1 // pred_check_branch
      %10 = sbr.rel (0) target = $region5
    $region4: #{tpu_custom_call.1} parent=1 // pred_region
      _
    $region5: #{tpu_custom_call.1} parent=1 // pred_fallthru
      _
    // Predicated region
    $region6: #{tpu_custom_call.1} parent=1 // pred_check
      _
    $region7: #{tpu_custom_call.1} parent=1 // pred_check_branch
      %12 = sbr.rel (0) target = $region9
    $region8: #{tpu_custom_call.1} parent=1 // pred_region
      _
    $region9: #{tpu_custom_call.1} parent=1 // pred_fallthru
      _
    // Predicated region
    $region10: #{tpu_custom_call.1} parent=1 // pred_check
      _
    $region11: #{tpu_custom_call.1} parent=1 // pred_check_branch
      %14 = sbr.rel (0) target = $region13
    $region12: #{tpu_custom_call.1} parent=1 // pred_region
      _
    $region13: #{tpu_custom_call.1} parent=1 // pred_fallthru
      _
    %v15 = vld [vmem:[%s1] sm:$0xff]
    %v16 = vld [vmem:[%s1 + $0x8] sm:$0xff]
    %v17 = vld [vmem:[%s1 + $0x10] sm:$0xff]
    %v18 = vld [vmem:[%s1 + $0x18] sm:$0xff]
    %v19 = vld [vmem:[%s1 + $0x20] sm:$0xff]
    %v20 = vld [vmem:[%s1 + $0x28] sm:$0xff]
    %v21 = vld [vmem:[%s1 + $0x30] sm:$0xff]
    %v22 = vld [vmem:[%s1 + $0x38] sm:$0xff]
    %v23 = vld [vmem:[%s1 + $0x40] sm:$0xff]
    %v24 = vld [vmem:[%s1 + $0x48] sm:$0xff]
    %v25 = vld [vmem:[%s1 + $0x50] sm:$0xff]
    %v26 = vld [vmem:[%s1 + $0x58] sm:$0xff]
    %v27 = vld [vmem:[%s1 + $0x60] sm:$0xff]
    %v28 = vld [vmem:[%s1 + $0x68] sm:$0xff]
    %v29 = vld [vmem:[%s1 + $0x70] sm:$0xff]
    %v30 = vld [vmem:[%s1 + $0x78] sm:$0xff]
    %v31 = vld [vmem:[%s1 + $0x80] sm:$0xff]
    %v32 = vld [vmem:[%s1 + $0x88] sm:$0xff]
    %v33 = vld [vmem:[%s1 + $0x90] sm:$0xff]
    %v34 = vld [vmem:[%s1 + $0x98] sm:$0xff]
    %v35 = vld [vmem:[%s1 + $0xa0] sm:$0xff]
    %v36 = vld [vmem:[%s1 + $0xa8] sm:$0xff]
    %v37 = vld [vmem:[%s1 + $0xb0] sm:$0xff]
    %v38 = vld [vmem:[%s1 + $0xb8] sm:$0xff]
    %v39 = vld [vmem:[%s1 + $0xc0] sm:$0xff]
    %v40 = vld [vmem:[%s1 + $0xc8] sm:$0xff]
    %v41 = vld [vmem:[%s1 + $0xd0] sm:$0xff]
    %v42 = vld [vmem:[%s1 + $0xd8] sm:$0xff]
    %v43 = vld [vmem:[%s1 + $0xe0] sm:$0xff]
    %v44 = vld [vmem:[%s1 + $0xe8] sm:$0xff]
    %v45 = vld [vmem:[%s1 + $0xf0] sm:$0xff]
    %v46 = vld [vmem:[%s1 + $0xf8] sm:$0xff]
    %v47 = vld [vmem:[%s1 + $0x100] sm:$0xff]
    %v48 = vld [vmem:[%s1 + $0x108] sm:$0xff]
    %v49 = vld [vmem:[%s1 + $0x110] sm:$0xff]
    %v50 = vld [vmem:[%s1 + $0x118] sm:$0xff]
    %v51 = vld [vmem:[%s1 + $0x120] sm:$0xff]
    %v52 = vld [vmem:[%s1 + $0x128] sm:$0xff]
    %v53 = vld [vmem:[%s1 + $0x130] sm:$0xff]
    %v54 = vld [vmem:[%s1 + $0x138] sm:$0xff]
    %v55 = vld [vmem:[%s1 + $0x140] sm:$0xff]
    %v56 = vld [vmem:[%s1 + $0x148] sm:$0xff]
    %v57 = vld [vmem:[%s1 + $0x150] sm:$0xff]
    %v58 = vld [vmem:[%s1 + $0x158] sm:$0xff]
    %v59 = vld [vmem:[%s1 + $0x160] sm:$0xff]
    %v60 = vld [vmem:[%s1 + $0x168] sm:$0xff]
    %v61 = vld [vmem:[%s1 + $0x170] sm:$0xff]
    %v62 = vld [vmem:[%s1 + $0x178] sm:$0xff]
    %v63 = vld [vmem:[%s1 + $0x180] sm:$0xff]
    %v64 = vld [vmem:[%s1 + $0x188] sm:$0xff]
    %v65 = vld [vmem:[%s1 + $0x190] sm:$0xff]
    %v66 = vld [vmem:[%s1 + $0x198] sm:$0xff]
    %v67 = vld [vmem:[%s1 + $0x1a0] sm:$0xff]
    %v68 = vld [vmem:[%s1 + $0x1a8] sm:$0xff]
    %v69 = vld [vmem:[%s1 + $0x1b0] sm:$0xff]
    %v70 = vld [vmem:[%s1 + $0x1b8] sm:$0xff]
    %v71 = vld [vmem:[%s1 + $0x1c0] sm:$0xff]
    %v72 = vld [vmem:[%s1 + $0x1c8] sm:$0xff]
    %v73 = vld [vmem:[%s1 + $0x1d0] sm:$0xff]
    %v74 = vld [vmem:[%s1 + $0x1d8] sm:$0xff]
    %v75 = vld [vmem:[%s1 + $0x1e0] sm:$0xff]
    %v76 = vld [vmem:[%s1 + $0x1e8] sm:$0xff]
    %v77 = vld [vmem:[%s1 + $0x1f0] sm:$0xff]
    %v78 = vld [vmem:[%s1 + $0x1f8] sm:$0xff]
    %v79 = vld [vmem:[%s1 + $0x200] sm:$0xff]
    %v80 = vld [vmem:[%s1 + $0x208] sm:$0xff]
    %v81 = vld [vmem:[%s1 + $0x210] sm:$0xff]
    %v82 = vld [vmem:[%s1 + $0x218] sm:$0xff]
    %v83 = vld [vmem:[%s1 + $0x220] sm:$0xff]
    %v84 = vld [vmem:[%s1 + $0x228] sm:$0xff]
    %v85 = vld [vmem:[%s1 + $0x230] sm:$0xff]
    %v86 = vld [vmem:[%s1 + $0x238] sm:$0xff]
    %v87 = vld [vmem:[%s1 + $0x240] sm:$0xff]
    %v88 = vld [vmem:[%s1 + $0x248] sm:$0xff]
    %v89 = vld [vmem:[%s1 + $0x250] sm:$0xff]
    %v90 = vld [vmem:[%s1 + $0x258] sm:$0xff]
    %v91 = vld [vmem:[%s1 + $0x260] sm:$0xff]
    %v92 = vld [vmem:[%s1 + $0x268] sm:$0xff]
    %v93 = vld [vmem:[%s1 + $0x270] sm:$0xff]
    %v94 = vld [vmem:[%s1 + $0x278] sm:$0xff]
    %v95 = vld [vmem:[%s1 + $0x280] sm:$0xff]
    %v96 = vld [vmem:[%s1 + $0x288] sm:$0xff]
    %v97 = vld [vmem:[%s1 + $0x290] sm:$0xff]
    %v98 = vld [vmem:[%s1 + $0x298] sm:$0xff]
    %v99 = vld [vmem:[%s1 + $0x2a0] sm:$0xff]
    %v100 = vld [vmem:[%s1 + $0x2a8] sm:$0xff]
    %v101 = vld [vmem:[%s1 + $0x2b0] sm:$0xff]
    %v102 = vld [vmem:[%s1 + $0x2b8] sm:$0xff]
    %v103 = vld [vmem:[%s1 + $0x2c0] sm:$0xff]
    %v104 = vld [vmem:[%s1 + $0x2c8] sm:$0xff]
    %v105 = vld [vmem:[%s1 + $0x2d0] sm:$0xff]
    %v106 = vld [vmem:[%s1 + $0x2d8] sm:$0xff]
    %v107 = vld [vmem:[%s1 + $0x2e0] sm:$0xff]
    %v108 = vld [vmem:[%s1 + $0x2e8] sm:$0xff]
    %v109 = vld [vmem:[%s1 + $0x2f0] sm:$0xff]
    %v110 = vld [vmem:[%s1 + $0x2f8] sm:$0xff]
    %v111 = vld [vmem:[%s1 + $0x300] sm:$0xff]
    %v112 = vld [vmem:[%s1 + $0x308] sm:$0xff]
    %v113 = vld [vmem:[%s1 + $0x310] sm:$0xff]
    %v114 = vld [vmem:[%s1 + $0x318] sm:$0xff]
    %v115 = vld [vmem:[%s1 + $0x320] sm:$0xff]
    %v116 = vld [vmem:[%s1 + $0x328] sm:$0xff]
    %v117 = vld [vmem:[%s1 + $0x330] sm:$0xff]
    %v118 = vld [vmem:[%s1 + $0x338] sm:$0xff]
    %v119 = vld [vmem:[%s1 + $0x340] sm:$0xff]
    %v120 = vld [vmem:[%s1 + $0x348] sm:$0xff]
    %v121 = vld [vmem:[%s1 + $0x350] sm:$0xff]
    %v122 = vld [vmem:[%s1 + $0x358] sm:$0xff]
    %v123 = vld [vmem:[%s1 + $0x360] sm:$0xff]
    %v124 = vld [vmem:[%s1 + $0x368] sm:$0xff]
    %v125 = vld [vmem:[%s1 + $0x370] sm:$0xff]
    %v126 = vld [vmem:[%s1 + $0x378] sm:$0xff]
    %v127 = vld [vmem:[%s1 + $0x380] sm:$0xff]
    %v128 = vld [vmem:[%s1 + $0x388] sm:$0xff]
    %v129 = vld [vmem:[%s1 + $0x390] sm:$0xff]
    %v130 = vld [vmem:[%s1 + $0x398] sm:$0xff]
    %v131 = vld [vmem:[%s1 + $0x3a0] sm:$0xff]
    %v132 = vld [vmem:[%s1 + $0x3a8] sm:$0xff]
    %v133 = vld [vmem:[%s1 + $0x3b0] sm:$0xff]
    %v134 = vld [vmem:[%s1 + $0x3b8] sm:$0xff]
    %v135 = vld [vmem:[%s1 + $0x3c0] sm:$0xff]
    %v136 = vld [vmem:[%s1 + $0x3c8] sm:$0xff]
    %v137 = vld [vmem:[%s1 + $0x3d0] sm:$0xff]
    %v138 = vld [vmem:[%s1 + $0x3d8] sm:$0xff]
    %v139 = vld [vmem:[%s1 + $0x3e0] sm:$0xff]
    %v140 = vld [vmem:[%s1 + $0x3e8] sm:$0xff]
    %v141 = vld [vmem:[%s1 + $0x3f0] sm:$0xff]
    %v142 = vld [vmem:[%s1 + $0x3f8] sm:$0xff]
    %v143 = vld [vmem:[%s1 + $0x400] sm:$0xff]
    %v144 = vld [vmem:[%s1 + $0x408] sm:$0xff]
    %v145 = vld [vmem:[%s1 + $0x410] sm:$0xff]
    %v146 = vld [vmem:[%s1 + $0x418] sm:$0xff]
    %v147 = vld [vmem:[%s1 + $0x420] sm:$0xff]
    %v148 = vld [vmem:[%s1 + $0x428] sm:$0xff]
    %v149 = vld [vmem:[%s1 + $0x430] sm:$0xff]
    %v150 = vld [vmem:[%s1 + $0x438] sm:$0xff]
    %v151 = vld [vmem:[%s1 + $0x440] sm:$0xff]
    %v152 = vld [vmem:[%s1 + $0x448] sm:$0xff]
    %v153 = vld [vmem:[%s1 + $0x450] sm:$0xff]
    %v154 = vld [vmem:[%s1 + $0x458] sm:$0xff]
    %v155 = vld [vmem:[%s1 + $0x460] sm:$0xff]
    %v156 = vld [vmem:[%s1 + $0x468] sm:$0xff]
    %v157 = vld [vmem:[%s1 + $0x470] sm:$0xff]
    %v158 = vld [vmem:[%s1 + $0x478] sm:$0xff]
    %v159 = vld [vmem:[%s1 + $0x480] sm:$0xff]
    %v160 = vld [vmem:[%s1 + $0x488] sm:$0xff]
    %v161 = vld [vmem:[%s1 + $0x490] sm:$0xff]
    %v162 = vld [vmem:[%s1 + $0x498] sm:$0xff]
    %v163 = vld [vmem:[%s1 + $0x4a0] sm:$0xff]
    %v164 = vld [vmem:[%s1 + $0x4a8] sm:$0xff]
    %v165 = vld [vmem:[%s1 + $0x4b0] sm:$0xff]
    %v166 = vld [vmem:[%s1 + $0x4b8] sm:$0xff]
    %v167 = vld [vmem:[%s1 + $0x4c0] sm:$0xff]
    %v168 = vld [vmem:[%s1 + $0x4c8] sm:$0xff]
    %v169 = vld [vmem:[%s1 + $0x4d0] sm:$0xff]
    %v170 = vld [vmem:[%s1 + $0x4d8] sm:$0xff]
    %v171 = vld [vmem:[%s1 + $0x4e0] sm:$0xff]
    %v172 = vld [vmem:[%s1 + $0x4e8] sm:$0xff]
    %v173 = vld [vmem:[%s1 + $0x4f0] sm:$0xff]
    %v174 = vld [vmem:[%s1 + $0x4f8] sm:$0xff]
    %v175 = vld [vmem:[%s1 + $0x500] sm:$0xff]
    %v176 = vld [vmem:[%s1 + $0x508] sm:$0xff]
    %v177 = vld [vmem:[%s1 + $0x510] sm:$0xff]
    %v178 = vld [vmem:[%s1 + $0x518] sm:$0xff]
    %v179 = vld [vmem:[%s1 + $0x520] sm:$0xff]
    %v180 = vld [vmem:[%s1 + $0x528] sm:$0xff]
    %v181 = vld [vmem:[%s1 + $0x530] sm:$0xff]
    %v182 = vld [vmem:[%s1 + $0x538] sm:$0xff]
    %v183 = vld [vmem:[%s1 + $0x540] sm:$0xff]
    %v184 = vld [vmem:[%s1 + $0x548] sm:$0xff]
    %v185 = vld [vmem:[%s1 + $0x550] sm:$0xff]
    %v186 = vld [vmem:[%s1 + $0x558] sm:$0xff]
    %v187 = vld [vmem:[%s1 + $0x560] sm:$0xff]
    %v188 = vld [vmem:[%s1 + $0x568] sm:$0xff]
    %v189 = vld [vmem:[%s1 + $0x570] sm:$0xff]
    %v190 = vld [vmem:[%s1 + $0x578] sm:$0xff]
    %v191 = vld [vmem:[%s1 + $0x580] sm:$0xff]
    %v192 = vld [vmem:[%s1 + $0x588] sm:$0xff]
    %v193 = vld [vmem:[%s1 + $0x590] sm:$0xff]
    %v194 = vld [vmem:[%s1 + $0x598] sm:$0xff]
    %v195 = vld [vmem:[%s1 + $0x5a0] sm:$0xff]
    %v196 = vld [vmem:[%s1 + $0x5a8] sm:$0xff]
    %v197 = vld [vmem:[%s1 + $0x5b0] sm:$0xff]
    %v198 = vld [vmem:[%s1 + $0x5b8] sm:$0xff]
    %v199 = vld [vmem:[%s1 + $0x5c0] sm:$0xff]
    %v200 = vld [vmem:[%s1 + $0x5c8] sm:$0xff]
    %v201 = vld [vmem:[%s1 + $0x5d0] sm:$0xff]
    %v202 = vld [vmem:[%s1 + $0x5d8] sm:$0xff]
    %v203 = vld [vmem:[%s1 + $0x5e0] sm:$0xff]
    %v204 = vld [vmem:[%s1 + $0x5e8] sm:$0xff]
    %v205 = vld [vmem:[%s1 + $0x5f0] sm:$0xff]
    %v206 = vld [vmem:[%s1 + $0x5f8] sm:$0xff]
    %v207 = vld [vmem:[%s1 + $0x600] sm:$0xff]
    %v208 = vld [vmem:[%s1 + $0x608] sm:$0xff]
    %v209 = vld [vmem:[%s1 + $0x610] sm:$0xff]
    %v210 = vld [vmem:[%s1 + $0x618] sm:$0xff]
    %v211 = vld [vmem:[%s1 + $0x620] sm:$0xff]
    %v212 = vld [vmem:[%s1 + $0x628] sm:$0xff]
    %v213 = vld [vmem:[%s1 + $0x630] sm:$0xff]
    %v214 = vld [vmem:[%s1 + $0x638] sm:$0xff]
    %v215 = vld [vmem:[%s1 + $0x640] sm:$0xff]
    %v216 = vld [vmem:[%s1 + $0x648] sm:$0xff]
    %v217 = vld [vmem:[%s1 + $0x650] sm:$0xff]
    %v218 = vld [vmem:[%s1 + $0x658] sm:$0xff]
    %v219 = vld [vmem:[%s1 + $0x660] sm:$0xff]
    %v220 = vld [vmem:[%s1 + $0x668] sm:$0xff]
    %v221 = vld [vmem:[%s1 + $0x670] sm:$0xff]
    %v222 = vld [vmem:[%s1 + $0x678] sm:$0xff]
    %v223 = vld [vmem:[%s1 + $0x680] sm:$0xff]
    %v224 = vld [vmem:[%s1 + $0x688] sm:$0xff]
    %v225 = vld [vmem:[%s1 + $0x690] sm:$0xff]
    %v226 = vld [vmem:[%s1 + $0x698] sm:$0xff]
    %v227 = vld [vmem:[%s1 + $0x6a0] sm:$0xff]
    %v228 = vld [vmem:[%s1 + $0x6a8] sm:$0xff]
    %v229 = vld [vmem:[%s1 + $0x6b0] sm:$0xff]
    %v230 = vld [vmem:[%s1 + $0x6b8] sm:$0xff]
    %v231 = vld [vmem:[%s1 + $0x6c0] sm:$0xff]
    %v232 = vld [vmem:[%s1 + $0x6c8] sm:$0xff]
    %v233 = vld [vmem:[%s1 + $0x6d0] sm:$0xff]
    %v234 = vld [vmem:[%s1 + $0x6d8] sm:$0xff]
    %v235 = vld [vmem:[%s1 + $0x6e0] sm:$0xff]
    %v236 = vld [vmem:[%s1 + $0x6e8] sm:$0xff]
    %v237 = vld [vmem:[%s1 + $0x6f0] sm:$0xff]
    %v238 = vld [vmem:[%s1 + $0x6f8] sm:$0xff]
    %v239 = vld [vmem:[%s1 + $0x700] sm:$0xff]
    %v240 = vld [vmem:[%s1 + $0x708] sm:$0xff]
    %v241 = vld [vmem:[%s1 + $0x710] sm:$0xff]
    %v242 = vld [vmem:[%s1 + $0x718] sm:$0xff]
    %v243 = vld [vmem:[%s1 + $0x720] sm:$0xff]
    %v244 = vld [vmem:[%s1 + $0x728] sm:$0xff]
    %v245 = vld [vmem:[%s1 + $0x730] sm:$0xff]
    %v246 = vld [vmem:[%s1 + $0x738] sm:$0xff]
    %v247 = vld [vmem:[%s1 + $0x740] sm:$0xff]
    %v248 = vld [vmem:[%s1 + $0x748] sm:$0xff]
    %v249 = vld [vmem:[%s1 + $0x750] sm:$0xff]
    %v250 = vld [vmem:[%s1 + $0x758] sm:$0xff]
    %v251 = vld [vmem:[%s1 + $0x760] sm:$0xff]
    %v252 = vld [vmem:[%s1 + $0x768] sm:$0xff]
    %v253 = vld [vmem:[%s1 + $0x770] sm:$0xff]
    %v254 = vld [vmem:[%s1 + $0x778] sm:$0xff]
    %v255 = vld [vmem:[%s1 + $0x780] sm:$0xff]
    %v256 = vld [vmem:[%s1 + $0x788] sm:$0xff]
    %v257 = vld [vmem:[%s1 + $0x790] sm:$0xff]
    %v258 = vld [vmem:[%s1 + $0x798] sm:$0xff]
    %v259 = vld [vmem:[%s1 + $0x7a0] sm:$0xff]
    %v260 = vld [vmem:[%s1 + $0x7a8] sm:$0xff]
    %v261 = vld [vmem:[%s1 + $0x7b0] sm:$0xff]
    %v262 = vld [vmem:[%s1 + $0x7b8] sm:$0xff]
    %v263 = vld [vmem:[%s1 + $0x7c0] sm:$0xff]
    %v264 = vld [vmem:[%s1 + $0x7c8] sm:$0xff]
    %v265 = vld [vmem:[%s1 + $0x7d0] sm:$0xff]
    %v266 = vld [vmem:[%s1 + $0x7d8] sm:$0xff]
    %v267 = vld [vmem:[%s1 + $0x7e0] sm:$0xff]
    %v268 = vld [vmem:[%s1 + $0x7e8] sm:$0xff]
    %v269 = vld [vmem:[%s1 + $0x7f0] sm:$0xff]
    %v270 = vld [vmem:[%s1 + $0x7f8] sm:$0xff]
    %v271 = vld [vmem:[%s1 + $0x800] sm:$0xff]
    %v272 = vld [vmem:[%s1 + $0x808] sm:$0xff]
    %v273 = vld [vmem:[%s1 + $0x810] sm:$0xff]
    %v274 = vld [vmem:[%s1 + $0x818] sm:$0xff]
    %v275 = vld [vmem:[%s1 + $0x820] sm:$0xff]
    %v276 = vld [vmem:[%s1 + $0x828] sm:$0xff]
    %v277 = vld [vmem:[%s1 + $0x830] sm:$0xff]
    %v278 = vld [vmem:[%s1 + $0x838] sm:$0xff]
    %v279 = vld [vmem:[%s1 + $0x840] sm:$0xff]
    %v280 = vld [vmem:[%s1 + $0x848] sm:$0xff]
    %v281 = vld [vmem:[%s1 + $0x850] sm:$0xff]
    %v282 = vld [vmem:[%s1 + $0x858] sm:$0xff]
    %v283 = vld [vmem:[%s1 + $0x860] sm:$0xff]
    %v284 = vld [vmem:[%s1 + $0x868] sm:$0xff]
    %v285 = vld [vmem:[%s1 + $0x870] sm:$0xff]
    %v286 = vld [vmem:[%s1 + $0x878] sm:$0xff]
    %v287 = vld [vmem:[%s1 + $0x880] sm:$0xff]
    %v288 = vld [vmem:[%s1 + $0x888] sm:$0xff]
    %v289 = vld [vmem:[%s1 + $0x890] sm:$0xff]
    %v290 = vld [vmem:[%s1 + $0x898] sm:$0xff]
    %v291 = vld [vmem:[%s1 + $0x8a0] sm:$0xff]
    %v292 = vld [vmem:[%s1 + $0x8a8] sm:$0xff]
    %v293 = vld [vmem:[%s1 + $0x8b0] sm:$0xff]
    %v294 = vld [vmem:[%s1 + $0x8b8] sm:$0xff]
    %v295 = vld [vmem:[%s1 + $0x8c0] sm:$0xff]
    %v296 = vld [vmem:[%s1 + $0x8c8] sm:$0xff]
    %v297 = vld [vmem:[%s1 + $0x8d0] sm:$0xff]
    %v298 = vld [vmem:[%s1 + $0x8d8] sm:$0xff]
    %v299 = vld [vmem:[%s1 + $0x8e0] sm:$0xff]
    %v300 = vld [vmem:[%s1 + $0x8e8] sm:$0xff]
    %v301 = vld [vmem:[%s1 + $0x8f0] sm:$0xff]
    %v302 = vld [vmem:[%s1 + $0x8f8] sm:$0xff]
    %v303 = vld [vmem:[%s1 + $0x900] sm:$0xff]
    %v304 = vld [vmem:[%s1 + $0x908] sm:$0xff]
    %v305 = vld [vmem:[%s1 + $0x910] sm:$0xff]
    %v306 = vld [vmem:[%s1 + $0x918] sm:$0xff]
    %v307 = vld [vmem:[%s1 + $0x920] sm:$0xff]
    %v308 = vld [vmem:[%s1 + $0x928] sm:$0xff]
    %v309 = vld [vmem:[%s1 + $0x930] sm:$0xff]
    %v310 = vld [vmem:[%s1 + $0x938] sm:$0xff]
    %v311 = vld [vmem:[%s1 + $0x940] sm:$0xff]
    %v312 = vld [vmem:[%s1 + $0x948] sm:$0xff]
    %v313 = vld [vmem:[%s1 + $0x950] sm:$0xff]
    %v314 = vld [vmem:[%s1 + $0x958] sm:$0xff]
    %v315 = vld [vmem:[%s1 + $0x960] sm:$0xff]
    %v316 = vld [vmem:[%s1 + $0x968] sm:$0xff]
    %v317 = vld [vmem:[%s1 + $0x970] sm:$0xff]
    %v318 = vld [vmem:[%s1 + $0x978] sm:$0xff]
    %v319 = vld [vmem:[%s1 + $0x980] sm:$0xff]
    %v320 = vld [vmem:[%s1 + $0x988] sm:$0xff]
    %v321 = vld [vmem:[%s1 + $0x990] sm:$0xff]
    %v322 = vld [vmem:[%s1 + $0x998] sm:$0xff]
    %v323 = vld [vmem:[%s1 + $0x9a0] sm:$0xff]
    %v324 = vld [vmem:[%s1 + $0x9a8] sm:$0xff]
    %v325 = vld [vmem:[%s1 + $0x9b0] sm:$0xff]
    %v326 = vld [vmem:[%s1 + $0x9b8] sm:$0xff]
    %v327 = vld [vmem:[%s1 + $0x9c0] sm:$0xff]
    %v328 = vld [vmem:[%s1 + $0x9c8] sm:$0xff]
    %v329 = vld [vmem:[%s1 + $0x9d0] sm:$0xff]
    %v330 = vld [vmem:[%s1 + $0x9d8] sm:$0xff]
    %v331 = vld [vmem:[%s1 + $0x9e0] sm:$0xff]
    %v332 = vld [vmem:[%s1 + $0x9e8] sm:$0xff]
    %v333 = vld [vmem:[%s1 + $0x9f0] sm:$0xff]
    %v334 = vld [vmem:[%s1 + $0x9f8] sm:$0xff]
    %v335 = vld [vmem:[%s1 + $0xa00] sm:$0xff]
    %v336 = vld [vmem:[%s1 + $0xa08] sm:$0xff]
    %v337 = vld [vmem:[%s1 + $0xa10] sm:$0xff]
    %v338 = vld [vmem:[%s1 + $0xa18] sm:$0xff]
    %v339 = vld [vmem:[%s1 + $0xa20] sm:$0xff]
    %v340 = vld [vmem:[%s1 + $0xa28] sm:$0xff]
    %v341 = vld [vmem:[%s1 + $0xa30] sm:$0xff]
    %v342 = vld [vmem:[%s1 + $0xa38] sm:$0xff]
    %v343 = vld [vmem:[%s1 + $0xa40] sm:$0xff]
    %v344 = vld [vmem:[%s1 + $0xa48] sm:$0xff]
    %v345 = vld [vmem:[%s1 + $0xa50] sm:$0xff]
    %v346 = vld [vmem:[%s1 + $0xa58] sm:$0xff]
    %v347 = vld [vmem:[%s1 + $0xa60] sm:$0xff]
    %v348 = vld [vmem:[%s1 + $0xa68] sm:$0xff]
    %v349 = vld [vmem:[%s1 + $0xa70] sm:$0xff]
    %v350 = vld [vmem:[%s1 + $0xa78] sm:$0xff]
    %v351 = vld [vmem:[%s1 + $0xa80] sm:$0xff]
    %v352 = vld [vmem:[%s1 + $0xa88] sm:$0xff]
    %v353 = vld [vmem:[%s1 + $0xa90] sm:$0xff]
    %v354 = vld [vmem:[%s1 + $0xa98] sm:$0xff]
    %v355 = vld [vmem:[%s1 + $0xaa0] sm:$0xff]
    %v356 = vld [vmem:[%s1 + $0xaa8] sm:$0xff]
    %v357 = vld [vmem:[%s1 + $0xab0] sm:$0xff]
    %v358 = vld [vmem:[%s1 + $0xab8] sm:$0xff]
    %v359 = vld [vmem:[%s1 + $0xac0] sm:$0xff]
    %v360 = vld [vmem:[%s1 + $0xac8] sm:$0xff]
    %v361 = vld [vmem:[%s1 + $0xad0] sm:$0xff]
    %v362 = vld [vmem:[%s1 + $0xad8] sm:$0xff]
    %v363 = vld [vmem:[%s1 + $0xae0] sm:$0xff]
    %v364 = vld [vmem:[%s1 + $0xae8] sm:$0xff]
    %v365 = vld [vmem:[%s1 + $0xaf0] sm:$0xff]
    %v366 = vld [vmem:[%s1 + $0xaf8] sm:$0xff]
    %v367 = vld [vmem:[%s1 + $0xb00] sm:$0xff]
    %v368 = vld [vmem:[%s1 + $0xb08] sm:$0xff]
    %v369 = vld [vmem:[%s1 + $0xb10] sm:$0xff]
    %v370 = vld [vmem:[%s1 + $0xb18] sm:$0xff]
    %v371 = vld [vmem:[%s1 + $0xb20] sm:$0xff]
    %v372 = vld [vmem:[%s1 + $0xb28] sm:$0xff]
    %v373 = vld [vmem:[%s1 + $0xb30] sm:$0xff]
    %v374 = vld [vmem:[%s1 + $0xb38] sm:$0xff]
    %v375 = vld [vmem:[%s1 + $0xb40] sm:$0xff]
    %v376 = vld [vmem:[%s1 + $0xb48] sm:$0xff]
    %v377 = vld [vmem:[%s1 + $0xb50] sm:$0xff]
    %v378 = vld [vmem:[%s1 + $0xb58] sm:$0xff]
    %v379 = vld [vmem:[%s1 + $0xb60] sm:$0xff]
    %v380 = vld [vmem:[%s1 + $0xb68] sm:$0xff]
    %v381 = vld [vmem:[%s1 + $0xb70] sm:$0xff]
    %v382 = vld [vmem:[%s1 + $0xb78] sm:$0xff]
    %v383 = vld [vmem:[%s1 + $0xb80] sm:$0xff]
    %v384 = vld [vmem:[%s1 + $0xb88] sm:$0xff]
    %v385 = vld [vmem:[%s1 + $0xb90] sm:$0xff]
    %v386 = vld [vmem:[%s1 + $0xb98] sm:$0xff]
    %v387 = vld [vmem:[%s1 + $0xba0] sm:$0xff]
    %v388 = vld [vmem:[%s1 + $0xba8] sm:$0xff]
    %v389 = vld [vmem:[%s1 + $0xbb0] sm:$0xff]
    %v390 = vld [vmem:[%s1 + $0xbb8] sm:$0xff]
    %v391 = vld [vmem:[%s1 + $0xbc0] sm:$0xff]
    %v392 = vld [vmem:[%s1 + $0xbc8] sm:$0xff]
    %v393 = vld [vmem:[%s0] sm:$0xff]
    %v394 = vld [vmem:[%s0 + $0x8] sm:$0xff]
    %v395 = vld [vmem:[%s0 + $0x10] sm:$0xff]
    %v396 = vld [vmem:[%s0 + $0x18] sm:$0xff]
    %v397 = vld [vmem:[%s0 + $0x20] sm:$0xff]
    %v398 = vld [vmem:[%s0 + $0x28] sm:$0xff]
    %v399 = vld [vmem:[%s0 + $0x30] sm:$0xff]
    %v400 = vld [vmem:[%s0 + $0x38] sm:$0xff]
    %v401 = vld [vmem:[%s0 + $0x40] sm:$0xff]
    %v402 = vld [vmem:[%s0 + $0x48] sm:$0xff]
    %v403 = vld [vmem:[%s0 + $0x50] sm:$0xff]
    %v404 = vld [vmem:[%s0 + $0x58] sm:$0xff]
    %v405 = vld [vmem:[%s0 + $0x60] sm:$0xff]
    %v406 = vld [vmem:[%s0 + $0x68] sm:$0xff]
    %v407 = vld [vmem:[%s0 + $0x70] sm:$0xff]
    %v408 = vld [vmem:[%s0 + $0x78] sm:$0xff]
    %v409 = vld [vmem:[%s0 + $0x80] sm:$0xff]
    %v410 = vld [vmem:[%s0 + $0x88] sm:$0xff]
    %v411 = vld [vmem:[%s0 + $0x90] sm:$0xff]
    %v412 = vld [vmem:[%s0 + $0x98] sm:$0xff]
    %v413 = vld [vmem:[%s0 + $0xa0] sm:$0xff]
    %v414 = vld [vmem:[%s0 + $0xa8] sm:$0xff]
    %v415 = vld [vmem:[%s0 + $0xb0] sm:$0xff]
    %v416 = vld [vmem:[%s0 + $0xb8] sm:$0xff]
    %v417 = vld [vmem:[%s0 + $0xc0] sm:$0xff]
    %v418 = vld [vmem:[%s0 + $0xc8] sm:$0xff]
    %v419 = vld [vmem:[%s0 + $0xd0] sm:$0xff]
    %v420 = vld [vmem:[%s0 + $0xd8] sm:$0xff]
    %v421 = vld [vmem:[%s0 + $0xe0] sm:$0xff]
    %v422 = vld [vmem:[%s0 + $0xe8] sm:$0xff]
    %v423 = vld [vmem:[%s0 + $0xf0] sm:$0xff]
    %v424 = vld [vmem:[%s0 + $0xf8] sm:$0xff]
    %v425 = vld [vmem:[%s0 + $0x100] sm:$0xff]
    %vm426 = vcmask 64512
    %v428 = vsel %vm426, %v17, 0
    %v431 = vsel %vm426, %v20, 0
    %v434 = vsel %vm426, %v23, 0
    %v437 = vsel %vm426, %v26, 0
    %v440 = vsel %vm426, %v29, 0
    %v443 = vsel %vm426, %v32, 0
    %v446 = vsel %vm426, %v35, 0
    %v449 = vsel %vm426, %v38, 0
    %v452 = vsel %vm426, %v41, 0
    %v455 = vsel %vm426, %v44, 0
    %v458 = vsel %vm426, %v47, 0
    %v461 = vsel %vm426, %v50, 0
    %v464 = vsel %vm426, %v53, 0
    %v467 = vsel %vm426, %v56, 0
    %v470 = vsel %vm426, %v59, 0
    %v473 = vsel %vm426, %v62, 0
    %v476 = vsel %vm426, %v65, 0
    %v479 = vsel %vm426, %v68, 0
    %v482 = vsel %vm426, %v71, 0
    %v485 = vsel %vm426, %v74, 0
    %v488 = vsel %vm426, %v77, 0
    %v491 = vsel %vm426, %v80, 0
    %v494 = vsel %vm426, %v83, 0
    %v497 = vsel %vm426, %v86, 0
    %v500 = vsel %vm426, %v89, 0
    %v503 = vsel %vm426, %v92, 0
    %v506 = vsel %vm426, %v95, 0
    %v509 = vsel %vm426, %v98, 0
    %v512 = vsel %vm426, %v101, 0
    %v515 = vsel %vm426, %v104, 0
    %v518 = vsel %vm426, %v107, 0
    %v521 = vsel %vm426, %v110, 0
    %v524 = vsel %vm426, %v113, 0
    %v527 = vsel %vm426, %v116, 0
    %v530 = vsel %vm426, %v119, 0
    %v533 = vsel %vm426, %v122, 0
    %v536 = vsel %vm426, %v125, 0
    %v539 = vsel %vm426, %v128, 0
    %v542 = vsel %vm426, %v131, 0
    %v545 = vsel %vm426, %v134, 0
    %v548 = vsel %vm426, %v137, 0
    %v551 = vsel %vm426, %v140, 0
    %v554 = vsel %vm426, %v143, 0
    %v557 = vsel %vm426, %v146, 0
    %v560 = vsel %vm426, %v149, 0
    %v563 = vsel %vm426, %v152, 0
    %v566 = vsel %vm426, %v155, 0
    %v569 = vsel %vm426, %v158, 0
    %v572 = vsel %vm426, %v161, 0
    %v575 = vsel %vm426, %v164, 0
    %v578 = vsel %vm426, %v167, 0
    %v581 = vsel %vm426, %v170, 0
    %v584 = vsel %vm426, %v173, 0
    %v587 = vsel %vm426, %v176, 0
    %v590 = vsel %vm426, %v179, 0
    %v593 = vsel %vm426, %v182, 0
    %v596 = vsel %vm426, %v185, 0
    %v599 = vsel %vm426, %v188, 0
    %v602 = vsel %vm426, %v191, 0
    %v605 = vsel %vm426, %v194, 0
    %v608 = vsel %vm426, %v197, 0
    %v611 = vsel %vm426, %v200, 0
    %v614 = vsel %vm426, %v203, 0
    %v617 = vsel %vm426, %v206, 0
    %v620 = vsel %vm426, %v209, 0
    %v623 = vsel %vm426, %v212, 0
    %v626 = vsel %vm426, %v215, 0
    %v629 = vsel %vm426, %v218, 0
    %v632 = vsel %vm426, %v221, 0
    %v635 = vsel %vm426, %v224, 0
    %v638 = vsel %vm426, %v227, 0
    %v641 = vsel %vm426, %v230, 0
    %v644 = vsel %vm426, %v233, 0
    %v647 = vsel %vm426, %v236, 0
    %v650 = vsel %vm426, %v239, 0
    %v653 = vsel %vm426, %v242, 0
    %v656 = vsel %vm426, %v245, 0
    %v659 = vsel %vm426, %v248, 0
    %v662 = vsel %vm426, %v251, 0
    %v665 = vsel %vm426, %v254, 0
    %v668 = vsel %vm426, %v257, 0
    %v671 = vsel %vm426, %v260, 0
    %v674 = vsel %vm426, %v263, 0
    %v677 = vsel %vm426, %v266, 0
    %v680 = vsel %vm426, %v269, 0
    %v683 = vsel %vm426, %v272, 0
    %v686 = vsel %vm426, %v275, 0
    %v689 = vsel %vm426, %v278, 0
    %v692 = vsel %vm426, %v281, 0
    %v695 = vsel %vm426, %v284, 0
    %v698 = vsel %vm426, %v287, 0
    %v701 = vsel %vm426, %v290, 0
    %v704 = vsel %vm426, %v293, 0
    %v707 = vsel %vm426, %v296, 0
    %v710 = vsel %vm426, %v299, 0
    %v713 = vsel %vm426, %v302, 0
    %v716 = vsel %vm426, %v305, 0
    %v719 = vsel %vm426, %v308, 0
    %v722 = vsel %vm426, %v311, 0
    %v725 = vsel %vm426, %v314, 0
    %v728 = vsel %vm426, %v317, 0
    %v731 = vsel %vm426, %v320, 0
    %v734 = vsel %vm426, %v323, 0
    %v737 = vsel %vm426, %v326, 0
    %v740 = vsel %vm426, %v329, 0
    %v743 = vsel %vm426, %v332, 0
    %v746 = vsel %vm426, %v335, 0
    %v749 = vsel %vm426, %v338, 0
    %v752 = vsel %vm426, %v341, 0
    %v755 = vsel %vm426, %v344, 0
    %v758 = vsel %vm426, %v347, 0
    %v761 = vsel %vm426, %v350, 0
    %v764 = vsel %vm426, %v353, 0
    %v767 = vsel %vm426, %v356, 0
    %v770 = vsel %vm426, %v359, 0
    %v773 = vsel %vm426, %v362, 0
    %v776 = vsel %vm426, %v365, 0
    %v779 = vsel %vm426, %v368, 0
    %v782 = vsel %vm426, %v371, 0
    %v785 = vsel %vm426, %v374, 0
    %v788 = vsel %vm426, %v377, 0
    %v791 = vsel %vm426, %v380, 0
    %v794 = vsel %vm426, %v383, 0
    %v797 = vsel %vm426, %v386, 0
    %v800 = vsel %vm426, %v389, 0
    %v803 = vsel %vm426, %v392, 0
    %805 = vmatpush.msra.mxu0 %v408
    %806 = vmatpush.msra.mxu0 %v407
    %807 = vmatpush.msra.mxu0 %v406
    %808 = vmatpush.msra.mxu0 %v405
    %809 = vmatpush.msra.mxu0 %v404
    %810 = vmatpush.msra.mxu0 %v403
    %811 = vmatpush.msra.mxu0 %v402
    %812 = vmatpush.msra.mxu0 %v401
    %813 = vmatpush.msra.mxu0 %v400
    %814 = vmatpush.msra.mxu0 %v399
    %815 = vmatpush.msra.mxu0 %v398
    %816 = vmatpush.msra.mxu0 %v397
    %817 = vmatpush.msra.mxu0 %v396
    %818 = vmatpush.msra.mxu0 %v395
    %819 = vmatpush.msra.mxu0 %v394
    %820 = vmatpush.msra.mxu0 %v393
    %821 = vmatmul.f32.gmra.mxu0 %v15
    %v822 = vpop.f32.mrf.mxu0
    %v823 = vadd.f32 0.0, %v822
    %824 = vmatmul.f32.gmra.mxu0 %v18
    %v825 = vpop.f32.mrf.mxu0
    %v826 = vadd.f32 0.0, %v825
    %827 = vmatmul.f32.gmra.mxu0 %v21
    %v828 = vpop.f32.mrf.mxu0
    %v829 = vadd.f32 0.0, %v828
    %830 = vmatmul.f32.gmra.mxu0 %v24
    %v831 = vpop.f32.mrf.mxu0
    %v832 = vadd.f32 0.0, %v831
    %833 = vmatmul.f32.gmra.mxu0 %v27
    %v834 = vpop.f32.mrf.mxu0
    %v835 = vadd.f32 0.0, %v834
    %836 = vmatmul.f32.gmra.mxu0 %v30
    %v837 = vpop.f32.mrf.mxu0
    %v838 = vadd.f32 0.0, %v837
    %839 = vmatmul.f32.gmra.mxu0 %v33
    %v840 = vpop.f32.mrf.mxu0
    %v841 = vadd.f32 0.0, %v840
    %842 = vmatmul.f32.gmra.mxu0 %v36
    %v843 = vpop.f32.mrf.mxu0
    %v844 = vadd.f32 0.0, %v843
    %845 = vmatmul.f32.gmra.mxu0 %v39
    %v846 = vpop.f32.mrf.mxu0
    %v847 = vadd.f32 0.0, %v846
    %848 = vmatmul.f32.gmra.mxu0 %v42
    %v849 = vpop.f32.mrf.mxu0
    %v850 = vadd.f32 0.0, %v849
    %851 = vmatmul.f32.gmra.mxu0 %v45
    %v852 = vpop.f32.mrf.mxu0
    %v853 = vadd.f32 0.0, %v852
    %854 = vmatmul.f32.gmra.mxu0 %v48
    %v855 = vpop.f32.mrf.mxu0
    %v856 = vadd.f32 0.0, %v855
    %857 = vmatmul.f32.gmra.mxu0 %v51
    %v858 = vpop.f32.mrf.mxu0
    %v859 = vadd.f32 0.0, %v858
    %860 = vmatmul.f32.gmra.mxu0 %v54
    %v861 = vpop.f32.mrf.mxu0
    %v862 = vadd.f32 0.0, %v861
    %863 = vmatmul.f32.gmra.mxu0 %v57
    %v864 = vpop.f32.mrf.mxu0
    %v865 = vadd.f32 0.0, %v864
    %866 = vmatmul.f32.gmra.mxu0 %v60
    %v867 = vpop.f32.mrf.mxu0
    %v868 = vadd.f32 0.0, %v867
    %869 = vmatmul.f32.gmra.mxu0 %v63
    %v870 = vpop.f32.mrf.mxu0
    %v871 = vadd.f32 0.0, %v870
    %872 = vmatmul.f32.gmra.mxu0 %v66
    %v873 = vpop.f32.mrf.mxu0
    %v874 = vadd.f32 0.0, %v873
    %875 = vmatmul.f32.gmra.mxu0 %v69
    %v876 = vpop.f32.mrf.mxu0
    %v877 = vadd.f32 0.0, %v876
    %878 = vmatmul.f32.gmra.mxu0 %v72
    %v879 = vpop.f32.mrf.mxu0
    %v880 = vadd.f32 0.0, %v879
    %881 = vmatmul.f32.gmra.mxu0 %v75
    %v882 = vpop.f32.mrf.mxu0
    %v883 = vadd.f32 0.0, %v882
    %884 = vmatmul.f32.gmra.mxu0 %v78
    %v885 = vpop.f32.mrf.mxu0
    %v886 = vadd.f32 0.0, %v885
    %887 = vmatmul.f32.gmra.mxu0 %v81
    %v888 = vpop.f32.mrf.mxu0
    %v889 = vadd.f32 0.0, %v888
    %890 = vmatmul.f32.gmra.mxu0 %v84
    %v891 = vpop.f32.mrf.mxu0
    %v892 = vadd.f32 0.0, %v891
    %893 = vmatmul.f32.gmra.mxu0 %v87
    %v894 = vpop.f32.mrf.mxu0
    %v895 = vadd.f32 0.0, %v894
    %896 = vmatmul.f32.gmra.mxu0 %v90
    %v897 = vpop.f32.mrf.mxu0
    %v898 = vadd.f32 0.0, %v897
    %899 = vmatmul.f32.gmra.mxu0 %v93
    %v900 = vpop.f32.mrf.mxu0
    %v901 = vadd.f32 0.0, %v900
    %902 = vmatmul.f32.gmra.mxu0 %v96
    %v903 = vpop.f32.mrf.mxu0
    %v904 = vadd.f32 0.0, %v903
    %905 = vmatmul.f32.gmra.mxu0 %v99
    %v906 = vpop.f32.mrf.mxu0
    %v907 = vadd.f32 0.0, %v906
    %908 = vmatmul.f32.gmra.mxu0 %v102
    %v909 = vpop.f32.mrf.mxu0
    %v910 = vadd.f32 0.0, %v909
    %911 = vmatmul.f32.gmra.mxu0 %v105
    %v912 = vpop.f32.mrf.mxu0
    %v913 = vadd.f32 0.0, %v912
    %914 = vmatmul.f32.gmra.mxu0 %v108
    %v915 = vpop.f32.mrf.mxu0
    %v916 = vadd.f32 0.0, %v915
    %917 = vmatmul.f32.gmra.mxu0 %v111
    %v918 = vpop.f32.mrf.mxu0
    %v919 = vadd.f32 0.0, %v918
    %920 = vmatmul.f32.gmra.mxu0 %v114
    %v921 = vpop.f32.mrf.mxu0
    %v922 = vadd.f32 0.0, %v921
    %923 = vmatmul.f32.gmra.mxu0 %v117
    %v924 = vpop.f32.mrf.mxu0
    %v925 = vadd.f32 0.0, %v924
    %926 = vmatmul.f32.gmra.mxu0 %v120
    %v927 = vpop.f32.mrf.mxu0
    %v928 = vadd.f32 0.0, %v927
    %929 = vmatmul.f32.gmra.mxu0 %v123
    %v930 = vpop.f32.mrf.mxu0
    %v931 = vadd.f32 0.0, %v930
    %932 = vmatmul.f32.gmra.mxu0 %v126
    %v933 = vpop.f32.mrf.mxu0
    %v934 = vadd.f32 0.0, %v933
    %935 = vmatmul.f32.gmra.mxu0 %v129
    %v936 = vpop.f32.mrf.mxu0
    %v937 = vadd.f32 0.0, %v936
    %938 = vmatmul.f32.gmra.mxu0 %v132
    %v939 = vpop.f32.mrf.mxu0
    %v940 = vadd.f32 0.0, %v939
    %941 = vmatmul.f32.gmra.mxu0 %v135
    %v942 = vpop.f32.mrf.mxu0
    %v943 = vadd.f32 0.0, %v942
    %944 = vmatmul.f32.gmra.mxu0 %v138
    %v945 = vpop.f32.mrf.mxu0
    %v946 = vadd.f32 0.0, %v945
    %947 = vmatmul.f32.gmra.mxu0 %v141
    %v948 = vpop.f32.mrf.mxu0
    %v949 = vadd.f32 0.0, %v948
    %950 = vmatmul.f32.gmra.mxu0 %v144
    %v951 = vpop.f32.mrf.mxu0
    %v952 = vadd.f32 0.0, %v951
    %953 = vmatmul.f32.gmra.mxu0 %v147
    %v954 = vpop.f32.mrf.mxu0
    %v955 = vadd.f32 0.0, %v954
    %956 = vmatmul.f32.gmra.mxu0 %v150
    %v957 = vpop.f32.mrf.mxu0
    %v958 = vadd.f32 0.0, %v957
    %959 = vmatmul.f32.gmra.mxu0 %v153
    %v960 = vpop.f32.mrf.mxu0
    %v961 = vadd.f32 0.0, %v960
    %962 = vmatmul.f32.gmra.mxu0 %v156
    %v963 = vpop.f32.mrf.mxu0
    %v964 = vadd.f32 0.0, %v963
    %965 = vmatmul.f32.gmra.mxu0 %v159
    %v966 = vpop.f32.mrf.mxu0
    %v967 = vadd.f32 0.0, %v966
    %968 = vmatmul.f32.gmra.mxu0 %v162
    %v969 = vpop.f32.mrf.mxu0
    %v970 = vadd.f32 0.0, %v969
    %971 = vmatmul.f32.gmra.mxu0 %v165
    %v972 = vpop.f32.mrf.mxu0
    %v973 = vadd.f32 0.0, %v972
    %974 = vmatmul.f32.gmra.mxu0 %v168
    %v975 = vpop.f32.mrf.mxu0
    %v976 = vadd.f32 0.0, %v975
    %977 = vmatmul.f32.gmra.mxu0 %v171
    %v978 = vpop.f32.mrf.mxu0
    %v979 = vadd.f32 0.0, %v978
    %980 = vmatmul.f32.gmra.mxu0 %v174
    %v981 = vpop.f32.mrf.mxu0
    %v982 = vadd.f32 0.0, %v981
    %983 = vmatmul.f32.gmra.mxu0 %v177
    %v984 = vpop.f32.mrf.mxu0
    %v985 = vadd.f32 0.0, %v984
    %986 = vmatmul.f32.gmra.mxu0 %v180
    %v987 = vpop.f32.mrf.mxu0
    %v988 = vadd.f32 0.0, %v987
    %989 = vmatmul.f32.gmra.mxu0 %v183
    %v990 = vpop.f32.mrf.mxu0
    %v991 = vadd.f32 0.0, %v990
    %992 = vmatmul.f32.gmra.mxu0 %v186
    %v993 = vpop.f32.mrf.mxu0
    %v994 = vadd.f32 0.0, %v993
    %995 = vmatmul.f32.gmra.mxu0 %v189
    %v996 = vpop.f32.mrf.mxu0
    %v997 = vadd.f32 0.0, %v996
    %998 = vmatmul.f32.gmra.mxu0 %v192
    %v999 = vpop.f32.mrf.mxu0
    %v1000 = vadd.f32 0.0, %v999
    %1001 = vmatmul.f32.gmra.mxu0 %v195
    %v1002 = vpop.f32.mrf.mxu0
    %v1003 = vadd.f32 0.0, %v1002
    %1004 = vmatmul.f32.gmra.mxu0 %v198
    %v1005 = vpop.f32.mrf.mxu0
    %v1006 = vadd.f32 0.0, %v1005
    %1007 = vmatmul.f32.gmra.mxu0 %v201
    %v1008 = vpop.f32.mrf.mxu0
    %v1009 = vadd.f32 0.0, %v1008
    %1010 = vmatmul.f32.gmra.mxu0 %v204
    %v1011 = vpop.f32.mrf.mxu0
    %v1012 = vadd.f32 0.0, %v1011
    %1013 = vmatmul.f32.gmra.mxu0 %v207
    %v1014 = vpop.f32.mrf.mxu0
    %v1015 = vadd.f32 0.0, %v1014
    %1016 = vmatmul.f32.gmra.mxu0 %v210
    %v1017 = vpop.f32.mrf.mxu0
    %v1018 = vadd.f32 0.0, %v1017
    %1019 = vmatmul.f32.gmra.mxu0 %v213
    %v1020 = vpop.f32.mrf.mxu0
    %v1021 = vadd.f32 0.0, %v1020
    %1022 = vmatmul.f32.gmra.mxu0 %v216
    %v1023 = vpop.f32.mrf.mxu0
    %v1024 = vadd.f32 0.0, %v1023
    %1025 = vmatmul.f32.gmra.mxu0 %v219
    %v1026 = vpop.f32.mrf.mxu0
    %v1027 = vadd.f32 0.0, %v1026
    %1028 = vmatmul.f32.gmra.mxu0 %v222
    %v1029 = vpop.f32.mrf.mxu0
    %v1030 = vadd.f32 0.0, %v1029
    %1031 = vmatmul.f32.gmra.mxu0 %v225
    %v1032 = vpop.f32.mrf.mxu0
    %v1033 = vadd.f32 0.0, %v1032
    %1034 = vmatmul.f32.gmra.mxu0 %v228
    %v1035 = vpop.f32.mrf.mxu0
    %v1036 = vadd.f32 0.0, %v1035
    %1037 = vmatmul.f32.gmra.mxu0 %v231
    %v1038 = vpop.f32.mrf.mxu0
    %v1039 = vadd.f32 0.0, %v1038
    %1040 = vmatmul.f32.gmra.mxu0 %v234
    %v1041 = vpop.f32.mrf.mxu0
    %v1042 = vadd.f32 0.0, %v1041
    %1043 = vmatmul.f32.gmra.mxu0 %v237
    %v1044 = vpop.f32.mrf.mxu0
    %v1045 = vadd.f32 0.0, %v1044
    %1046 = vmatmul.f32.gmra.mxu0 %v240
    %v1047 = vpop.f32.mrf.mxu0
    %v1048 = vadd.f32 0.0, %v1047
    %1049 = vmatmul.f32.gmra.mxu0 %v243
    %v1050 = vpop.f32.mrf.mxu0
    %v1051 = vadd.f32 0.0, %v1050
    %1052 = vmatmul.f32.gmra.mxu0 %v246
    %v1053 = vpop.f32.mrf.mxu0
    %v1054 = vadd.f32 0.0, %v1053
    %1055 = vmatmul.f32.gmra.mxu0 %v249
    %v1056 = vpop.f32.mrf.mxu0
    %v1057 = vadd.f32 0.0, %v1056
    %1058 = vmatmul.f32.gmra.mxu0 %v252
    %v1059 = vpop.f32.mrf.mxu0
    %v1060 = vadd.f32 0.0, %v1059
    %1061 = vmatmul.f32.gmra.mxu0 %v255
    %v1062 = vpop.f32.mrf.mxu0
    %v1063 = vadd.f32 0.0, %v1062
    %1064 = vmatmul.f32.gmra.mxu0 %v258
    %v1065 = vpop.f32.mrf.mxu0
    %v1066 = vadd.f32 0.0, %v1065
    %1067 = vmatmul.f32.gmra.mxu0 %v261
    %v1068 = vpop.f32.mrf.mxu0
    %v1069 = vadd.f32 0.0, %v1068
    %1070 = vmatmul.f32.gmra.mxu0 %v264
    %v1071 = vpop.f32.mrf.mxu0
    %v1072 = vadd.f32 0.0, %v1071
    %1073 = vmatmul.f32.gmra.mxu0 %v267
    %v1074 = vpop.f32.mrf.mxu0
    %v1075 = vadd.f32 0.0, %v1074
    %1076 = vmatmul.f32.gmra.mxu0 %v270
    %v1077 = vpop.f32.mrf.mxu0
    %v1078 = vadd.f32 0.0, %v1077
    %1079 = vmatmul.f32.gmra.mxu0 %v273
    %v1080 = vpop.f32.mrf.mxu0
    %v1081 = vadd.f32 0.0, %v1080
    %1082 = vmatmul.f32.gmra.mxu0 %v276
    %v1083 = vpop.f32.mrf.mxu0
    %v1084 = vadd.f32 0.0, %v1083
    %1085 = vmatmul.f32.gmra.mxu0 %v279
    %v1086 = vpop.f32.mrf.mxu0
    %v1087 = vadd.f32 0.0, %v1086
    %1088 = vmatmul.f32.gmra.mxu0 %v282
    %v1089 = vpop.f32.mrf.mxu0
    %v1090 = vadd.f32 0.0, %v1089
    %1091 = vmatmul.f32.gmra.mxu0 %v285
    %v1092 = vpop.f32.mrf.mxu0
    %v1093 = vadd.f32 0.0, %v1092
    %1094 = vmatmul.f32.gmra.mxu0 %v288
    %v1095 = vpop.f32.mrf.mxu0
    %v1096 = vadd.f32 0.0, %v1095
    %1097 = vmatmul.f32.gmra.mxu0 %v291
    %v1098 = vpop.f32.mrf.mxu0
    %v1099 = vadd.f32 0.0, %v1098
    %1100 = vmatmul.f32.gmra.mxu0 %v294
    %v1101 = vpop.f32.mrf.mxu0
    %v1102 = vadd.f32 0.0, %v1101
    %1103 = vmatmul.f32.gmra.mxu0 %v297
    %v1104 = vpop.f32.mrf.mxu0
    %v1105 = vadd.f32 0.0, %v1104
    %1106 = vmatmul.f32.gmra.mxu0 %v300
    %v1107 = vpop.f32.mrf.mxu0
    %v1108 = vadd.f32 0.0, %v1107
    %1109 = vmatmul.f32.gmra.mxu0 %v303
    %v1110 = vpop.f32.mrf.mxu0
    %v1111 = vadd.f32 0.0, %v1110
    %1112 = vmatmul.f32.gmra.mxu0 %v306
    %v1113 = vpop.f32.mrf.mxu0
    %v1114 = vadd.f32 0.0, %v1113
    %1115 = vmatmul.f32.gmra.mxu0 %v309
    %v1116 = vpop.f32.mrf.mxu0
    %v1117 = vadd.f32 0.0, %v1116
    %1118 = vmatmul.f32.gmra.mxu0 %v312
    %v1119 = vpop.f32.mrf.mxu0
    %v1120 = vadd.f32 0.0, %v1119
    %1121 = vmatmul.f32.gmra.mxu0 %v315
    %v1122 = vpop.f32.mrf.mxu0
    %v1123 = vadd.f32 0.0, %v1122
    %1124 = vmatmul.f32.gmra.mxu0 %v318
    %v1125 = vpop.f32.mrf.mxu0
    %v1126 = vadd.f32 0.0, %v1125
    %1127 = vmatmul.f32.gmra.mxu0 %v321
    %v1128 = vpop.f32.mrf.mxu0
    %v1129 = vadd.f32 0.0, %v1128
    %1130 = vmatmul.f32.gmra.mxu0 %v324
    %v1131 = vpop.f32.mrf.mxu0
    %v1132 = vadd.f32 0.0, %v1131
    %1133 = vmatmul.f32.gmra.mxu0 %v327
    %v1134 = vpop.f32.mrf.mxu0
    %v1135 = vadd.f32 0.0, %v1134
    %1136 = vmatmul.f32.gmra.mxu0 %v330
    %v1137 = vpop.f32.mrf.mxu0
    %v1138 = vadd.f32 0.0, %v1137
    %1139 = vmatmul.f32.gmra.mxu0 %v333
    %v1140 = vpop.f32.mrf.mxu0
    %v1141 = vadd.f32 0.0, %v1140
    %1142 = vmatmul.f32.gmra.mxu0 %v336
    %v1143 = vpop.f32.mrf.mxu0
    %v1144 = vadd.f32 0.0, %v1143
    %1145 = vmatmul.f32.gmra.mxu0 %v339
    %v1146 = vpop.f32.mrf.mxu0
    %v1147 = vadd.f32 0.0, %v1146
    %1148 = vmatmul.f32.gmra.mxu0 %v342
    %v1149 = vpop.f32.mrf.mxu0
    %v1150 = vadd.f32 0.0, %v1149
    %1151 = vmatmul.f32.gmra.mxu0 %v345
    %v1152 = vpop.f32.mrf.mxu0
    %v1153 = vadd.f32 0.0, %v1152
    %1154 = vmatmul.f32.gmra.mxu0 %v348
    %v1155 = vpop.f32.mrf.mxu0
    %v1156 = vadd.f32 0.0, %v1155
    %1157 = vmatmul.f32.gmra.mxu0 %v351
    %v1158 = vpop.f32.mrf.mxu0
    %v1159 = vadd.f32 0.0, %v1158
    %1160 = vmatmul.f32.gmra.mxu0 %v354
    %v1161 = vpop.f32.mrf.mxu0
    %v1162 = vadd.f32 0.0, %v1161
    %1163 = vmatmul.f32.gmra.mxu0 %v357
    %v1164 = vpop.f32.mrf.mxu0
    %v1165 = vadd.f32 0.0, %v1164
    %1166 = vmatmul.f32.gmra.mxu0 %v360
    %v1167 = vpop.f32.mrf.mxu0
    %v1168 = vadd.f32 0.0, %v1167
    %1169 = vmatmul.f32.gmra.mxu0 %v363
    %v1170 = vpop.f32.mrf.mxu0
    %v1171 = vadd.f32 0.0, %v1170
    %1172 = vmatmul.f32.gmra.mxu0 %v366
    %v1173 = vpop.f32.mrf.mxu0
    %v1174 = vadd.f32 0.0, %v1173
    %1175 = vmatmul.f32.gmra.mxu0 %v369
    %v1176 = vpop.f32.mrf.mxu0
    %v1177 = vadd.f32 0.0, %v1176
    %1178 = vmatmul.f32.gmra.mxu0 %v372
    %v1179 = vpop.f32.mrf.mxu0
    %v1180 = vadd.f32 0.0, %v1179
    %1181 = vmatmul.f32.gmra.mxu0 %v375
    %v1182 = vpop.f32.mrf.mxu0
    %v1183 = vadd.f32 0.0, %v1182
    %1184 = vmatmul.f32.gmra.mxu0 %v378
    %v1185 = vpop.f32.mrf.mxu0
    %v1186 = vadd.f32 0.0, %v1185
    %1187 = vmatmul.f32.gmra.mxu0 %v381
    %v1188 = vpop.f32.mrf.mxu0
    %v1189 = vadd.f32 0.0, %v1188
    %1190 = vmatmul.f32.gmra.mxu0 %v384
    %v1191 = vpop.f32.mrf.mxu0
    %v1192 = vadd.f32 0.0, %v1191
    %1193 = vmatmul.f32.gmra.mxu0 %v387
    %v1194 = vpop.f32.mrf.mxu0
    %v1195 = vadd.f32 0.0, %v1194
    %1196 = vmatmul.f32.gmra.mxu0 %v390
    %v1197 = vpop.f32.mrf.mxu0
    %v1198 = vadd.f32 0.0, %v1197
    %1199 = vdwg.mxu0
    %1200 = vmatpush.msra.mxu0 %v424
    %1201 = vmatpush.msra.mxu0 %v423
    %1202 = vmatpush.msra.mxu0 %v422
    %1203 = vmatpush.msra.mxu0 %v421
    %1204 = vmatpush.msra.mxu0 %v420
    %1205 = vmatpush.msra.mxu0 %v419
    %1206 = vmatpush.msra.mxu0 %v418
    %1207 = vmatpush.msra.mxu0 %v417
    %1208 = vmatpush.msra.mxu0 %v416
    %1209 = vmatpush.msra.mxu0 %v415
    %1210 = vmatpush.msra.mxu0 %v414
    %1211 = vmatpush.msra.mxu0 %v413
    %1212 = vmatpush.msra.mxu0 %v412
    %1213 = vmatpush.msra.mxu0 %v411
    %1214 = vmatpush.msra.mxu0 %v410
    %1215 = vmatpush.msra.mxu0 %v409
    %1216 = vmatmul.f32.gmra.mxu0 %v16
    %v1217 = vpop.f32.mrf.mxu0
    %v1218 = vadd.f32 %v823, %v1217
    %1219 = vmatmul.f32.gmra.mxu0 %v19
    %v1220 = vpop.f32.mrf.mxu0
    %v1221 = vadd.f32 %v826, %v1220
    %1222 = vmatmul.f32.gmra.mxu0 %v22
    %v1223 = vpop.f32.mrf.mxu0
    %v1224 = vadd.f32 %v829, %v1223
    %1225 = vmatmul.f32.gmra.mxu0 %v25
    %v1226 = vpop.f32.mrf.mxu0
    %v1227 = vadd.f32 %v832, %v1226
    %1228 = vmatmul.f32.gmra.mxu0 %v28
    %v1229 = vpop.f32.mrf.mxu0
    %v1230 = vadd.f32 %v835, %v1229
    %1231 = vmatmul.f32.gmra.mxu0 %v31
    %v1232 = vpop.f32.mrf.mxu0
    %v1233 = vadd.f32 %v838, %v1232
    %1234 = vmatmul.f32.gmra.mxu0 %v34
    %v1235 = vpop.f32.mrf.mxu0
    %v1236 = vadd.f32 %v841, %v1235
    %1237 = vmatmul.f32.gmra.mxu0 %v37
    %v1238 = vpop.f32.mrf.mxu0
    %v1239 = vadd.f32 %v844, %v1238
    %1240 = vmatmul.f32.gmra.mxu0 %v40
    %v1241 = vpop.f32.mrf.mxu0
    %v1242 = vadd.f32 %v847, %v1241
    %1243 = vmatmul.f32.gmra.mxu0 %v43
    %v1244 = vpop.f32.mrf.mxu0
    %v1245 = vadd.f32 %v850, %v1244
    %1246 = vmatmul.f32.gmra.mxu0 %v46
    %v1247 = vpop.f32.mrf.mxu0
    %v1248 = vadd.f32 %v853, %v1247
    %1249 = vmatmul.f32.gmra.mxu0 %v49
    %v1250 = vpop.f32.mrf.mxu0
    %v1251 = vadd.f32 %v856, %v1250
    %1252 = vmatmul.f32.gmra.mxu0 %v52
    %v1253 = vpop.f32.mrf.mxu0
    %v1254 = vadd.f32 %v859, %v1253
    %1255 = vmatmul.f32.gmra.mxu0 %v55
    %v1256 = vpop.f32.mrf.mxu0
    %v1257 = vadd.f32 %v862, %v1256
    %1258 = vmatmul.f32.gmra.mxu0 %v58
    %v1259 = vpop.f32.mrf.mxu0
    %v1260 = vadd.f32 %v865, %v1259
    %1261 = vmatmul.f32.gmra.mxu0 %v61
    %v1262 = vpop.f32.mrf.mxu0
    %v1263 = vadd.f32 %v868, %v1262
    %1264 = vmatmul.f32.gmra.mxu0 %v64
    %v1265 = vpop.f32.mrf.mxu0
    %v1266 = vadd.f32 %v871, %v1265
    %1267 = vmatmul.f32.gmra.mxu0 %v67
    %v1268 = vpop.f32.mrf.mxu0
    %v1269 = vadd.f32 %v874, %v1268
    %1270 = vmatmul.f32.gmra.mxu0 %v70
    %v1271 = vpop.f32.mrf.mxu0
    %v1272 = vadd.f32 %v877, %v1271
    %1273 = vmatmul.f32.gmra.mxu0 %v73
    %v1274 = vpop.f32.mrf.mxu0
    %v1275 = vadd.f32 %v880, %v1274
    %1276 = vmatmul.f32.gmra.mxu0 %v76
    %v1277 = vpop.f32.mrf.mxu0
    %v1278 = vadd.f32 %v883, %v1277
    %1279 = vmatmul.f32.gmra.mxu0 %v79
    %v1280 = vpop.f32.mrf.mxu0
    %v1281 = vadd.f32 %v886, %v1280
    %1282 = vmatmul.f32.gmra.mxu0 %v82
    %v1283 = vpop.f32.mrf.mxu0
    %v1284 = vadd.f32 %v889, %v1283
    %1285 = vmatmul.f32.gmra.mxu0 %v85
    %v1286 = vpop.f32.mrf.mxu0
    %v1287 = vadd.f32 %v892, %v1286
    %1288 = vmatmul.f32.gmra.mxu0 %v88
    %v1289 = vpop.f32.mrf.mxu0
    %v1290 = vadd.f32 %v895, %v1289
    %1291 = vmatmul.f32.gmra.mxu0 %v91
    %v1292 = vpop.f32.mrf.mxu0
    %v1293 = vadd.f32 %v898, %v1292
    %1294 = vmatmul.f32.gmra.mxu0 %v94
    %v1295 = vpop.f32.mrf.mxu0
    %v1296 = vadd.f32 %v901, %v1295
    %1297 = vmatmul.f32.gmra.mxu0 %v97
    %v1298 = vpop.f32.mrf.mxu0
    %v1299 = vadd.f32 %v904, %v1298
    %1300 = vmatmul.f32.gmra.mxu0 %v100
    %v1301 = vpop.f32.mrf.mxu0
    %v1302 = vadd.f32 %v907, %v1301
    %1303 = vmatmul.f32.gmra.mxu0 %v103
    %v1304 = vpop.f32.mrf.mxu0
    %v1305 = vadd.f32 %v910, %v1304
    %1306 = vmatmul.f32.gmra.mxu0 %v106
    %v1307 = vpop.f32.mrf.mxu0
    %v1308 = vadd.f32 %v913, %v1307
    %1309 = vmatmul.f32.gmra.mxu0 %v109
    %v1310 = vpop.f32.mrf.mxu0
    %v1311 = vadd.f32 %v916, %v1310
    %1312 = vmatmul.f32.gmra.mxu0 %v112
    %v1313 = vpop.f32.mrf.mxu0
    %v1314 = vadd.f32 %v919, %v1313
    %1315 = vmatmul.f32.gmra.mxu0 %v115
    %v1316 = vpop.f32.mrf.mxu0
    %v1317 = vadd.f32 %v922, %v1316
    %1318 = vmatmul.f32.gmra.mxu0 %v118
    %v1319 = vpop.f32.mrf.mxu0
    %v1320 = vadd.f32 %v925, %v1319
    %1321 = vmatmul.f32.gmra.mxu0 %v121
    %v1322 = vpop.f32.mrf.mxu0
    %v1323 = vadd.f32 %v928, %v1322
    %1324 = vmatmul.f32.gmra.mxu0 %v124
    %v1325 = vpop.f32.mrf.mxu0
    %v1326 = vadd.f32 %v931, %v1325
    %1327 = vmatmul.f32.gmra.mxu0 %v127
    %v1328 = vpop.f32.mrf.mxu0
    %v1329 = vadd.f32 %v934, %v1328
    %1330 = vmatmul.f32.gmra.mxu0 %v130
    %v1331 = vpop.f32.mrf.mxu0
    %v1332 = vadd.f32 %v937, %v1331
    %1333 = vmatmul.f32.gmra.mxu0 %v133
    %v1334 = vpop.f32.mrf.mxu0
    %v1335 = vadd.f32 %v940, %v1334
    %1336 = vmatmul.f32.gmra.mxu0 %v136
    %v1337 = vpop.f32.mrf.mxu0
    %v1338 = vadd.f32 %v943, %v1337
    %1339 = vmatmul.f32.gmra.mxu0 %v139
    %v1340 = vpop.f32.mrf.mxu0
    %v1341 = vadd.f32 %v946, %v1340
    %1342 = vmatmul.f32.gmra.mxu0 %v142
    %v1343 = vpop.f32.mrf.mxu0
    %v1344 = vadd.f32 %v949, %v1343
    %1345 = vmatmul.f32.gmra.mxu0 %v145
    %v1346 = vpop.f32.mrf.mxu0
    %v1347 = vadd.f32 %v952, %v1346
    %1348 = vmatmul.f32.gmra.mxu0 %v148
    %v1349 = vpop.f32.mrf.mxu0
    %v1350 = vadd.f32 %v955, %v1349
    %1351 = vmatmul.f32.gmra.mxu0 %v151
    %v1352 = vpop.f32.mrf.mxu0
    %v1353 = vadd.f32 %v958, %v1352
    %1354 = vmatmul.f32.gmra.mxu0 %v154
    %v1355 = vpop.f32.mrf.mxu0
    %v1356 = vadd.f32 %v961, %v1355
    %1357 = vmatmul.f32.gmra.mxu0 %v157
    %v1358 = vpop.f32.mrf.mxu0
    %v1359 = vadd.f32 %v964, %v1358
    %1360 = vmatmul.f32.gmra.mxu0 %v160
    %v1361 = vpop.f32.mrf.mxu0
    %v1362 = vadd.f32 %v967, %v1361
    %1363 = vmatmul.f32.gmra.mxu0 %v163
    %v1364 = vpop.f32.mrf.mxu0
    %v1365 = vadd.f32 %v970, %v1364
    %1366 = vmatmul.f32.gmra.mxu0 %v166
    %v1367 = vpop.f32.mrf.mxu0
    %v1368 = vadd.f32 %v973, %v1367
    %1369 = vmatmul.f32.gmra.mxu0 %v169
    %v1370 = vpop.f32.mrf.mxu0
    %v1371 = vadd.f32 %v976, %v1370
    %1372 = vmatmul.f32.gmra.mxu0 %v172
    %v1373 = vpop.f32.mrf.mxu0
    %v1374 = vadd.f32 %v979, %v1373
    %1375 = vmatmul.f32.gmra.mxu0 %v175
    %v1376 = vpop.f32.mrf.mxu0
    %v1377 = vadd.f32 %v982, %v1376
    %1378 = vmatmul.f32.gmra.mxu0 %v178
    %v1379 = vpop.f32.mrf.mxu0
    %v1380 = vadd.f32 %v985, %v1379
    %1381 = vmatmul.f32.gmra.mxu0 %v181
    %v1382 = vpop.f32.mrf.mxu0
    %v1383 = vadd.f32 %v988, %v1382
    %1384 = vmatmul.f32.gmra.mxu0 %v184
    %v1385 = vpop.f32.mrf.mxu0
    %v1386 = vadd.f32 %v991, %v1385
    %1387 = vmatmul.f32.gmra.mxu0 %v187
    %v1388 = vpop.f32.mrf.mxu0
    %v1389 = vadd.f32 %v994, %v1388
    %1390 = vmatmul.f32.gmra.mxu0 %v190
    %v1391 = vpop.f32.mrf.mxu0
    %v1392 = vadd.f32 %v997, %v1391
    %1393 = vmatmul.f32.gmra.mxu0 %v193
    %v1394 = vpop.f32.mrf.mxu0
    %v1395 = vadd.f32 %v1000, %v1394
    %1396 = vmatmul.f32.gmra.mxu0 %v196
    %v1397 = vpop.f32.mrf.mxu0
    %v1398 = vadd.f32 %v1003, %v1397
    %1399 = vmatmul.f32.gmra.mxu0 %v199
    %v1400 = vpop.f32.mrf.mxu0
    %v1401 = vadd.f32 %v1006, %v1400
    %1402 = vmatmul.f32.gmra.mxu0 %v202
    %v1403 = vpop.f32.mrf.mxu0
    %v1404 = vadd.f32 %v1009, %v1403
    %1405 = vmatmul.f32.gmra.mxu0 %v205
    %v1406 = vpop.f32.mrf.mxu0
    %v1407 = vadd.f32 %v1012, %v1406
    %1408 = vmatmul.f32.gmra.mxu0 %v208
    %v1409 = vpop.f32.mrf.mxu0
    %v1410 = vadd.f32 %v1015, %v1409
    %1411 = vmatmul.f32.gmra.mxu0 %v211
    %v1412 = vpop.f32.mrf.mxu0
    %v1413 = vadd.f32 %v1018, %v1412
    %1414 = vmatmul.f32.gmra.mxu0 %v214
    %v1415 = vpop.f32.mrf.mxu0
    %v1416 = vadd.f32 %v1021, %v1415
    %1417 = vmatmul.f32.gmra.mxu0 %v217
    %v1418 = vpop.f32.mrf.mxu0
    %v1419 = vadd.f32 %v1024, %v1418
    %1420 = vmatmul.f32.gmra.mxu0 %v220
    %v1421 = vpop.f32.mrf.mxu0
    %v1422 = vadd.f32 %v1027, %v1421
    %1423 = vmatmul.f32.gmra.mxu0 %v223
    %v1424 = vpop.f32.mrf.mxu0
    %v1425 = vadd.f32 %v1030, %v1424
    %1426 = vmatmul.f32.gmra.mxu0 %v226
    %v1427 = vpop.f32.mrf.mxu0
    %v1428 = vadd.f32 %v1033, %v1427
    %1429 = vmatmul.f32.gmra.mxu0 %v229
    %v1430 = vpop.f32.mrf.mxu0
    %v1431 = vadd.f32 %v1036, %v1430
    %1432 = vmatmul.f32.gmra.mxu0 %v232
    %v1433 = vpop.f32.mrf.mxu0
    %v1434 = vadd.f32 %v1039, %v1433
    %1435 = vmatmul.f32.gmra.mxu0 %v235
    %v1436 = vpop.f32.mrf.mxu0
    %v1437 = vadd.f32 %v1042, %v1436
    %1438 = vmatmul.f32.gmra.mxu0 %v238
    %v1439 = vpop.f32.mrf.mxu0
    %v1440 = vadd.f32 %v1045, %v1439
    %1441 = vmatmul.f32.gmra.mxu0 %v241
    %v1442 = vpop.f32.mrf.mxu0
    %v1443 = vadd.f32 %v1048, %v1442
    %1444 = vmatmul.f32.gmra.mxu0 %v244
    %v1445 = vpop.f32.mrf.mxu0
    %v1446 = vadd.f32 %v1051, %v1445
    %1447 = vmatmul.f32.gmra.mxu0 %v247
    %v1448 = vpop.f32.mrf.mxu0
    %v1449 = vadd.f32 %v1054, %v1448
    %1450 = vmatmul.f32.gmra.mxu0 %v250
    %v1451 = vpop.f32.mrf.mxu0
    %v1452 = vadd.f32 %v1057, %v1451
    %1453 = vmatmul.f32.gmra.mxu0 %v253
    %v1454 = vpop.f32.mrf.mxu0
    %v1455 = vadd.f32 %v1060, %v1454
    %1456 = vmatmul.f32.gmra.mxu0 %v256
    %v1457 = vpop.f32.mrf.mxu0
    %v1458 = vadd.f32 %v1063, %v1457
    %1459 = vmatmul.f32.gmra.mxu0 %v259
    %v1460 = vpop.f32.mrf.mxu0
    %v1461 = vadd.f32 %v1066, %v1460
    %1462 = vmatmul.f32.gmra.mxu0 %v262
    %v1463 = vpop.f32.mrf.mxu0
    %v1464 = vadd.f32 %v1069, %v1463
    %1465 = vmatmul.f32.gmra.mxu0 %v265
    %v1466 = vpop.f32.mrf.mxu0
    %v1467 = vadd.f32 %v1072, %v1466
    %1468 = vmatmul.f32.gmra.mxu0 %v268
    %v1469 = vpop.f32.mrf.mxu0
    %v1470 = vadd.f32 %v1075, %v1469
    %1471 = vmatmul.f32.gmra.mxu0 %v271
    %v1472 = vpop.f32.mrf.mxu0
    %v1473 = vadd.f32 %v1078, %v1472
    %1474 = vmatmul.f32.gmra.mxu0 %v274
    %v1475 = vpop.f32.mrf.mxu0
    %v1476 = vadd.f32 %v1081, %v1475
    %1477 = vmatmul.f32.gmra.mxu0 %v277
    %v1478 = vpop.f32.mrf.mxu0
    %v1479 = vadd.f32 %v1084, %v1478
    %1480 = vmatmul.f32.gmra.mxu0 %v280
    %v1481 = vpop.f32.mrf.mxu0
    %v1482 = vadd.f32 %v1087, %v1481
    %1483 = vmatmul.f32.gmra.mxu0 %v283
    %v1484 = vpop.f32.mrf.mxu0
    %v1485 = vadd.f32 %v1090, %v1484
    %1486 = vmatmul.f32.gmra.mxu0 %v286
    %v1487 = vpop.f32.mrf.mxu0
    %v1488 = vadd.f32 %v1093, %v1487
    %1489 = vmatmul.f32.gmra.mxu0 %v289
    %v1490 = vpop.f32.mrf.mxu0
    %v1491 = vadd.f32 %v1096, %v1490
    %1492 = vmatmul.f32.gmra.mxu0 %v292
    %v1493 = vpop.f32.mrf.mxu0
    %v1494 = vadd.f32 %v1099, %v1493
    %1495 = vmatmul.f32.gmra.mxu0 %v295
    %v1496 = vpop.f32.mrf.mxu0
    %v1497 = vadd.f32 %v1102, %v1496
    %1498 = vmatmul.f32.gmra.mxu0 %v298
    %v1499 = vpop.f32.mrf.mxu0
    %v1500 = vadd.f32 %v1105, %v1499
    %1501 = vmatmul.f32.gmra.mxu0 %v301
    %v1502 = vpop.f32.mrf.mxu0
    %v1503 = vadd.f32 %v1108, %v1502
    %1504 = vmatmul.f32.gmra.mxu0 %v304
    %v1505 = vpop.f32.mrf.mxu0
    %v1506 = vadd.f32 %v1111, %v1505
    %1507 = vmatmul.f32.gmra.mxu0 %v307
    %v1508 = vpop.f32.mrf.mxu0
    %v1509 = vadd.f32 %v1114, %v1508
    %1510 = vmatmul.f32.gmra.mxu0 %v310
    %v1511 = vpop.f32.mrf.mxu0
    %v1512 = vadd.f32 %v1117, %v1511
    %1513 = vmatmul.f32.gmra.mxu0 %v313
    %v1514 = vpop.f32.mrf.mxu0
    %v1515 = vadd.f32 %v1120, %v1514
    %1516 = vmatmul.f32.gmra.mxu0 %v316
    %v1517 = vpop.f32.mrf.mxu0
    %v1518 = vadd.f32 %v1123, %v1517
    %1519 = vmatmul.f32.gmra.mxu0 %v319
    %v1520 = vpop.f32.mrf.mxu0
    %v1521 = vadd.f32 %v1126, %v1520
    %1522 = vmatmul.f32.gmra.mxu0 %v322
    %v1523 = vpop.f32.mrf.mxu0
    %v1524 = vadd.f32 %v1129, %v1523
    %1525 = vmatmul.f32.gmra.mxu0 %v325
    %v1526 = vpop.f32.mrf.mxu0
    %v1527 = vadd.f32 %v1132, %v1526
    %1528 = vmatmul.f32.gmra.mxu0 %v328
    %v1529 = vpop.f32.mrf.mxu0
    %v1530 = vadd.f32 %v1135, %v1529
    %1531 = vmatmul.f32.gmra.mxu0 %v331
    %v1532 = vpop.f32.mrf.mxu0
    %v1533 = vadd.f32 %v1138, %v1532
    %1534 = vmatmul.f32.gmra.mxu0 %v334
    %v1535 = vpop.f32.mrf.mxu0
    %v1536 = vadd.f32 %v1141, %v1535
    %1537 = vmatmul.f32.gmra.mxu0 %v337
    %v1538 = vpop.f32.mrf.mxu0
    %v1539 = vadd.f32 %v1144, %v1538
    %1540 = vmatmul.f32.gmra.mxu0 %v340
    %v1541 = vpop.f32.mrf.mxu0
    %v1542 = vadd.f32 %v1147, %v1541
    %1543 = vmatmul.f32.gmra.mxu0 %v343
    %v1544 = vpop.f32.mrf.mxu0
    %v1545 = vadd.f32 %v1150, %v1544
    %1546 = vmatmul.f32.gmra.mxu0 %v346
    %v1547 = vpop.f32.mrf.mxu0
    %v1548 = vadd.f32 %v1153, %v1547
    %1549 = vmatmul.f32.gmra.mxu0 %v349
    %v1550 = vpop.f32.mrf.mxu0
    %v1551 = vadd.f32 %v1156, %v1550
    %1552 = vmatmul.f32.gmra.mxu0 %v352
    %v1553 = vpop.f32.mrf.mxu0
    %v1554 = vadd.f32 %v1159, %v1553
    %1555 = vmatmul.f32.gmra.mxu0 %v355
    %v1556 = vpop.f32.mrf.mxu0
    %v1557 = vadd.f32 %v1162, %v1556
    %1558 = vmatmul.f32.gmra.mxu0 %v358
    %v1559 = vpop.f32.mrf.mxu0
    %v1560 = vadd.f32 %v1165, %v1559
    %1561 = vmatmul.f32.gmra.mxu0 %v361
    %v1562 = vpop.f32.mrf.mxu0
    %v1563 = vadd.f32 %v1168, %v1562
    %1564 = vmatmul.f32.gmra.mxu0 %v364
    %v1565 = vpop.f32.mrf.mxu0
    %v1566 = vadd.f32 %v1171, %v1565
    %1567 = vmatmul.f32.gmra.mxu0 %v367
    %v1568 = vpop.f32.mrf.mxu0
    %v1569 = vadd.f32 %v1174, %v1568
    %1570 = vmatmul.f32.gmra.mxu0 %v370
    %v1571 = vpop.f32.mrf.mxu0
    %v1572 = vadd.f32 %v1177, %v1571
    %1573 = vmatmul.f32.gmra.mxu0 %v373
    %v1574 = vpop.f32.mrf.mxu0
    %v1575 = vadd.f32 %v1180, %v1574
    %1576 = vmatmul.f32.gmra.mxu0 %v376
    %v1577 = vpop.f32.mrf.mxu0
    %v1578 = vadd.f32 %v1183, %v1577
    %1579 = vmatmul.f32.gmra.mxu0 %v379
    %v1580 = vpop.f32.mrf.mxu0
    %v1581 = vadd.f32 %v1186, %v1580
    %1582 = vmatmul.f32.gmra.mxu0 %v382
    %v1583 = vpop.f32.mrf.mxu0
    %v1584 = vadd.f32 %v1189, %v1583
    %1585 = vmatmul.f32.gmra.mxu0 %v385
    %v1586 = vpop.f32.mrf.mxu0
    %v1587 = vadd.f32 %v1192, %v1586
    %1588 = vmatmul.f32.gmra.mxu0 %v388
    %v1589 = vpop.f32.mrf.mxu0
    %v1590 = vadd.f32 %v1195, %v1589
    %1591 = vmatmul.f32.gmra.mxu0 %v391
    %v1592 = vpop.f32.mrf.mxu0
    %v1593 = vadd.f32 %v1198, %v1592
    %1594 = vdwg.mxu0
    %1595 = vmatpush.msra.mxu0 0.0
    %1596 = vmatpush.msra.mxu0 0.0
    %1597 = vmatpush.msra.mxu0 0.0
    %1598 = vmatpush.msra.mxu0 0.0
    %1599 = vmatpush.msra.mxu0 0.0
    %1600 = vmatpush.msra.mxu0 0.0
    %1601 = vmatpush.msra.mxu0 0.0
    %1602 = vmatpush.msra.mxu0 0.0
    %1603 = vmatpush.msra.mxu0 0.0
    %1604 = vmatpush.msra.mxu0 0.0
    %1605 = vmatpush.msra.mxu0 0.0
    %1606 = vmatpush.msra.mxu0 0.0
    %1607 = vmatpush.msra.mxu0 0.0
    %1608 = vmatpush.msra.mxu0 0.0
    %1609 = vmatpush.msra.mxu0 0.0
    %1610 = vmatpush.msra.mxu0 %v425
    %1611 = vmatmul.f32.gmra.mxu0 %v428
    %v1612 = vpop.f32.mrf.mxu0
    %v1613 = vadd.f32 %v1218, %v1612
    %1614 = vmatmul.f32.gmra.mxu0 %v431
    %v1615 = vpop.f32.mrf.mxu0
    %v1616 = vadd.f32 %v1221, %v1615
    %1617 = vmatmul.f32.gmra.mxu0 %v434
    %v1618 = vpop.f32.mrf.mxu0
    %v1619 = vadd.f32 %v1224, %v1618
    %1620 = vmatmul.f32.gmra.mxu0 %v437
    %v1621 = vpop.f32.mrf.mxu0
    %v1622 = vadd.f32 %v1227, %v1621
    %1623 = vmatmul.f32.gmra.mxu0 %v440
    %v1624 = vpop.f32.mrf.mxu0
    %v1625 = vadd.f32 %v1230, %v1624
    %1626 = vmatmul.f32.gmra.mxu0 %v443
    %v1627 = vpop.f32.mrf.mxu0
    %v1628 = vadd.f32 %v1233, %v1627
    %1629 = vmatmul.f32.gmra.mxu0 %v446
    %v1630 = vpop.f32.mrf.mxu0
    %v1631 = vadd.f32 %v1236, %v1630
    %1632 = vmatmul.f32.gmra.mxu0 %v449
    %v1633 = vpop.f32.mrf.mxu0
    %v1634 = vadd.f32 %v1239, %v1633
    %1635 = vmatmul.f32.gmra.mxu0 %v452
    %v1636 = vpop.f32.mrf.mxu0
    %v1637 = vadd.f32 %v1242, %v1636
    %1638 = vmatmul.f32.gmra.mxu0 %v455
    %v1639 = vpop.f32.mrf.mxu0
    %v1640 = vadd.f32 %v1245, %v1639
    %1641 = vmatmul.f32.gmra.mxu0 %v458
    %v1642 = vpop.f32.mrf.mxu0
    %v1643 = vadd.f32 %v1248, %v1642
    %1644 = vmatmul.f32.gmra.mxu0 %v461
    %v1645 = vpop.f32.mrf.mxu0
    %v1646 = vadd.f32 %v1251, %v1645
    %1647 = vmatmul.f32.gmra.mxu0 %v464
    %v1648 = vpop.f32.mrf.mxu0
    %v1649 = vadd.f32 %v1254, %v1648
    %1650 = vmatmul.f32.gmra.mxu0 %v467
    %v1651 = vpop.f32.mrf.mxu0
    %v1652 = vadd.f32 %v1257, %v1651
    %1653 = vmatmul.f32.gmra.mxu0 %v470
    %v1654 = vpop.f32.mrf.mxu0
    %v1655 = vadd.f32 %v1260, %v1654
    %1656 = vmatmul.f32.gmra.mxu0 %v473
    %v1657 = vpop.f32.mrf.mxu0
    %v1658 = vadd.f32 %v1263, %v1657
    %1659 = vmatmul.f32.gmra.mxu0 %v476
    %v1660 = vpop.f32.mrf.mxu0
    %v1661 = vadd.f32 %v1266, %v1660
    %1662 = vmatmul.f32.gmra.mxu0 %v479
    %v1663 = vpop.f32.mrf.mxu0
    %v1664 = vadd.f32 %v1269, %v1663
    %1665 = vmatmul.f32.gmra.mxu0 %v482
    %v1666 = vpop.f32.mrf.mxu0
    %v1667 = vadd.f32 %v1272, %v1666
    %1668 = vmatmul.f32.gmra.mxu0 %v485
    %v1669 = vpop.f32.mrf.mxu0
    %v1670 = vadd.f32 %v1275, %v1669
    %1671 = vmatmul.f32.gmra.mxu0 %v488
    %v1672 = vpop.f32.mrf.mxu0
    %v1673 = vadd.f32 %v1278, %v1672
    %1674 = vmatmul.f32.gmra.mxu0 %v491
    %v1675 = vpop.f32.mrf.mxu0
    %v1676 = vadd.f32 %v1281, %v1675
    %1677 = vmatmul.f32.gmra.mxu0 %v494
    %v1678 = vpop.f32.mrf.mxu0
    %v1679 = vadd.f32 %v1284, %v1678
    %1680 = vmatmul.f32.gmra.mxu0 %v497
    %v1681 = vpop.f32.mrf.mxu0
    %v1682 = vadd.f32 %v1287, %v1681
    %1683 = vmatmul.f32.gmra.mxu0 %v500
    %v1684 = vpop.f32.mrf.mxu0
    %v1685 = vadd.f32 %v1290, %v1684
    %1686 = vmatmul.f32.gmra.mxu0 %v503
    %v1687 = vpop.f32.mrf.mxu0
    %v1688 = vadd.f32 %v1293, %v1687
    %1689 = vmatmul.f32.gmra.mxu0 %v506
    %v1690 = vpop.f32.mrf.mxu0
    %v1691 = vadd.f32 %v1296, %v1690
    %1692 = vmatmul.f32.gmra.mxu0 %v509
    %v1693 = vpop.f32.mrf.mxu0
    %v1694 = vadd.f32 %v1299, %v1693
    %1695 = vmatmul.f32.gmra.mxu0 %v512
    %v1696 = vpop.f32.mrf.mxu0
    %v1697 = vadd.f32 %v1302, %v1696
    %1698 = vmatmul.f32.gmra.mxu0 %v515
    %v1699 = vpop.f32.mrf.mxu0
    %v1700 = vadd.f32 %v1305, %v1699
    %1701 = vmatmul.f32.gmra.mxu0 %v518
    %v1702 = vpop.f32.mrf.mxu0
    %v1703 = vadd.f32 %v1308, %v1702
    %1704 = vmatmul.f32.gmra.mxu0 %v521
    %v1705 = vpop.f32.mrf.mxu0
    %v1706 = vadd.f32 %v1311, %v1705
    %1707 = vmatmul.f32.gmra.mxu0 %v524
    %v1708 = vpop.f32.mrf.mxu0
    %v1709 = vadd.f32 %v1314, %v1708
    %1710 = vmatmul.f32.gmra.mxu0 %v527
    %v1711 = vpop.f32.mrf.mxu0
    %v1712 = vadd.f32 %v1317, %v1711
    %1713 = vmatmul.f32.gmra.mxu0 %v530
    %v1714 = vpop.f32.mrf.mxu0
    %v1715 = vadd.f32 %v1320, %v1714
    %1716 = vmatmul.f32.gmra.mxu0 %v533
    %v1717 = vpop.f32.mrf.mxu0
    %v1718 = vadd.f32 %v1323, %v1717
    %1719 = vmatmul.f32.gmra.mxu0 %v536
    %v1720 = vpop.f32.mrf.mxu0
    %v1721 = vadd.f32 %v1326, %v1720
    %1722 = vmatmul.f32.gmra.mxu0 %v539
    %v1723 = vpop.f32.mrf.mxu0
    %v1724 = vadd.f32 %v1329, %v1723
    %1725 = vmatmul.f32.gmra.mxu0 %v542
    %v1726 = vpop.f32.mrf.mxu0
    %v1727 = vadd.f32 %v1332, %v1726
    %1728 = vmatmul.f32.gmra.mxu0 %v545
    %v1729 = vpop.f32.mrf.mxu0
    %v1730 = vadd.f32 %v1335, %v1729
    %1731 = vmatmul.f32.gmra.mxu0 %v548
    %v1732 = vpop.f32.mrf.mxu0
    %v1733 = vadd.f32 %v1338, %v1732
    %1734 = vmatmul.f32.gmra.mxu0 %v551
    %v1735 = vpop.f32.mrf.mxu0
    %v1736 = vadd.f32 %v1341, %v1735
    %1737 = vmatmul.f32.gmra.mxu0 %v554
    %v1738 = vpop.f32.mrf.mxu0
    %v1739 = vadd.f32 %v1344, %v1738
    %1740 = vmatmul.f32.gmra.mxu0 %v557
    %v1741 = vpop.f32.mrf.mxu0
    %v1742 = vadd.f32 %v1347, %v1741
    %1743 = vmatmul.f32.gmra.mxu0 %v560
    %v1744 = vpop.f32.mrf.mxu0
    %v1745 = vadd.f32 %v1350, %v1744
    %1746 = vmatmul.f32.gmra.mxu0 %v563
    %v1747 = vpop.f32.mrf.mxu0
    %v1748 = vadd.f32 %v1353, %v1747
    %1749 = vmatmul.f32.gmra.mxu0 %v566
    %v1750 = vpop.f32.mrf.mxu0
    %v1751 = vadd.f32 %v1356, %v1750
    %1752 = vmatmul.f32.gmra.mxu0 %v569
    %v1753 = vpop.f32.mrf.mxu0
    %v1754 = vadd.f32 %v1359, %v1753
    %1755 = vmatmul.f32.gmra.mxu0 %v572
    %v1756 = vpop.f32.mrf.mxu0
    %v1757 = vadd.f32 %v1362, %v1756
    %1758 = vmatmul.f32.gmra.mxu0 %v575
    %v1759 = vpop.f32.mrf.mxu0
    %v1760 = vadd.f32 %v1365, %v1759
    %1761 = vmatmul.f32.gmra.mxu0 %v578
    %v1762 = vpop.f32.mrf.mxu0
    %v1763 = vadd.f32 %v1368, %v1762
    %1764 = vmatmul.f32.gmra.mxu0 %v581
    %v1765 = vpop.f32.mrf.mxu0
    %v1766 = vadd.f32 %v1371, %v1765
    %1767 = vmatmul.f32.gmra.mxu0 %v584
    %v1768 = vpop.f32.mrf.mxu0
    %v1769 = vadd.f32 %v1374, %v1768
    %1770 = vmatmul.f32.gmra.mxu0 %v587
    %v1771 = vpop.f32.mrf.mxu0
    %v1772 = vadd.f32 %v1377, %v1771
    %1773 = vmatmul.f32.gmra.mxu0 %v590
    %v1774 = vpop.f32.mrf.mxu0
    %v1775 = vadd.f32 %v1380, %v1774
    %1776 = vmatmul.f32.gmra.mxu0 %v593
    %v1777 = vpop.f32.mrf.mxu0
    %v1778 = vadd.f32 %v1383, %v1777
    %1779 = vmatmul.f32.gmra.mxu0 %v596
    %v1780 = vpop.f32.mrf.mxu0
    %v1781 = vadd.f32 %v1386, %v1780
    %1782 = vmatmul.f32.gmra.mxu0 %v599
    %v1783 = vpop.f32.mrf.mxu0
    %v1784 = vadd.f32 %v1389, %v1783
    %1785 = vmatmul.f32.gmra.mxu0 %v602
    %v1786 = vpop.f32.mrf.mxu0
    %v1787 = vadd.f32 %v1392, %v1786
    %1788 = vmatmul.f32.gmra.mxu0 %v605
    %v1789 = vpop.f32.mrf.mxu0
    %v1790 = vadd.f32 %v1395, %v1789
    %1791 = vmatmul.f32.gmra.mxu0 %v608
    %v1792 = vpop.f32.mrf.mxu0
    %v1793 = vadd.f32 %v1398, %v1792
    %1794 = vmatmul.f32.gmra.mxu0 %v611
    %v1795 = vpop.f32.mrf.mxu0
    %v1796 = vadd.f32 %v1401, %v1795
    %1797 = vmatmul.f32.gmra.mxu0 %v614
    %v1798 = vpop.f32.mrf.mxu0
    %v1799 = vadd.f32 %v1404, %v1798
    %1800 = vmatmul.f32.gmra.mxu0 %v617
    %v1801 = vpop.f32.mrf.mxu0
    %v1802 = vadd.f32 %v1407, %v1801
    %1803 = vmatmul.f32.gmra.mxu0 %v620
    %v1804 = vpop.f32.mrf.mxu0
    %v1805 = vadd.f32 %v1410, %v1804
    %1806 = vmatmul.f32.gmra.mxu0 %v623
    %v1807 = vpop.f32.mrf.mxu0
    %v1808 = vadd.f32 %v1413, %v1807
    %1809 = vmatmul.f32.gmra.mxu0 %v626
    %v1810 = vpop.f32.mrf.mxu0
    %v1811 = vadd.f32 %v1416, %v1810
    %1812 = vmatmul.f32.gmra.mxu0 %v629
    %v1813 = vpop.f32.mrf.mxu0
    %v1814 = vadd.f32 %v1419, %v1813
    %1815 = vmatmul.f32.gmra.mxu0 %v632
    %v1816 = vpop.f32.mrf.mxu0
    %v1817 = vadd.f32 %v1422, %v1816
    %1818 = vmatmul.f32.gmra.mxu0 %v635
    %v1819 = vpop.f32.mrf.mxu0
    %v1820 = vadd.f32 %v1425, %v1819
    %1821 = vmatmul.f32.gmra.mxu0 %v638
    %v1822 = vpop.f32.mrf.mxu0
    %v1823 = vadd.f32 %v1428, %v1822
    %1824 = vmatmul.f32.gmra.mxu0 %v641
    %v1825 = vpop.f32.mrf.mxu0
    %v1826 = vadd.f32 %v1431, %v1825
    %1827 = vmatmul.f32.gmra.mxu0 %v644
    %v1828 = vpop.f32.mrf.mxu0
    %v1829 = vadd.f32 %v1434, %v1828
    %1830 = vmatmul.f32.gmra.mxu0 %v647
    %v1831 = vpop.f32.mrf.mxu0
    %v1832 = vadd.f32 %v1437, %v1831
    %1833 = vmatmul.f32.gmra.mxu0 %v650
    %v1834 = vpop.f32.mrf.mxu0
    %v1835 = vadd.f32 %v1440, %v1834
    %1836 = vmatmul.f32.gmra.mxu0 %v653
    %v1837 = vpop.f32.mrf.mxu0
    %v1838 = vadd.f32 %v1443, %v1837
    %1839 = vmatmul.f32.gmra.mxu0 %v656
    %v1840 = vpop.f32.mrf.mxu0
    %v1841 = vadd.f32 %v1446, %v1840
    %1842 = vmatmul.f32.gmra.mxu0 %v659
    %v1843 = vpop.f32.mrf.mxu0
    %v1844 = vadd.f32 %v1449, %v1843
    %1845 = vmatmul.f32.gmra.mxu0 %v662
    %v1846 = vpop.f32.mrf.mxu0
    %v1847 = vadd.f32 %v1452, %v1846
    %1848 = vmatmul.f32.gmra.mxu0 %v665
    %v1849 = vpop.f32.mrf.mxu0
    %v1850 = vadd.f32 %v1455, %v1849
    %1851 = vmatmul.f32.gmra.mxu0 %v668
    %v1852 = vpop.f32.mrf.mxu0
    %v1853 = vadd.f32 %v1458, %v1852
    %1854 = vmatmul.f32.gmra.mxu0 %v671
    %v1855 = vpop.f32.mrf.mxu0
    %v1856 = vadd.f32 %v1461, %v1855
    %1857 = vmatmul.f32.gmra.mxu0 %v674
    %v1858 = vpop.f32.mrf.mxu0
    %v1859 = vadd.f32 %v1464, %v1858
    %1860 = vmatmul.f32.gmra.mxu0 %v677
    %v1861 = vpop.f32.mrf.mxu0
    %v1862 = vadd.f32 %v1467, %v1861
    %1863 = vmatmul.f32.gmra.mxu0 %v680
    %v1864 = vpop.f32.mrf.mxu0
    %v1865 = vadd.f32 %v1470, %v1864
    %1866 = vmatmul.f32.gmra.mxu0 %v683
    %v1867 = vpop.f32.mrf.mxu0
    %v1868 = vadd.f32 %v1473, %v1867
    %1869 = vmatmul.f32.gmra.mxu0 %v686
    %v1870 = vpop.f32.mrf.mxu0
    %v1871 = vadd.f32 %v1476, %v1870
    %1872 = vmatmul.f32.gmra.mxu0 %v689
    %v1873 = vpop.f32.mrf.mxu0
    %v1874 = vadd.f32 %v1479, %v1873
    %1875 = vmatmul.f32.gmra.mxu0 %v692
    %v1876 = vpop.f32.mrf.mxu0
    %v1877 = vadd.f32 %v1482, %v1876
    %1878 = vmatmul.f32.gmra.mxu0 %v695
    %v1879 = vpop.f32.mrf.mxu0
    %v1880 = vadd.f32 %v1485, %v1879
    %1881 = vmatmul.f32.gmra.mxu0 %v698
    %v1882 = vpop.f32.mrf.mxu0
    %v1883 = vadd.f32 %v1488, %v1882
    %1884 = vmatmul.f32.gmra.mxu0 %v701
    %v1885 = vpop.f32.mrf.mxu0
    %v1886 = vadd.f32 %v1491, %v1885
    %1887 = vmatmul.f32.gmra.mxu0 %v704
    %v1888 = vpop.f32.mrf.mxu0
    %v1889 = vadd.f32 %v1494, %v1888
    %1890 = vmatmul.f32.gmra.mxu0 %v707
    %v1891 = vpop.f32.mrf.mxu0
    %v1892 = vadd.f32 %v1497, %v1891
    %1893 = vmatmul.f32.gmra.mxu0 %v710
    %v1894 = vpop.f32.mrf.mxu0
    %v1895 = vadd.f32 %v1500, %v1894
    %1896 = vmatmul.f32.gmra.mxu0 %v713
    %v1897 = vpop.f32.mrf.mxu0
    %v1898 = vadd.f32 %v1503, %v1897
    %1899 = vmatmul.f32.gmra.mxu0 %v716
    %v1900 = vpop.f32.mrf.mxu0
    %v1901 = vadd.f32 %v1506, %v1900
    %1902 = vmatmul.f32.gmra.mxu0 %v719
    %v1903 = vpop.f32.mrf.mxu0
    %v1904 = vadd.f32 %v1509, %v1903
    %1905 = vmatmul.f32.gmra.mxu0 %v722
    %v1906 = vpop.f32.mrf.mxu0
    %v1907 = vadd.f32 %v1512, %v1906
    %1908 = vmatmul.f32.gmra.mxu0 %v725
    %v1909 = vpop.f32.mrf.mxu0
    %v1910 = vadd.f32 %v1515, %v1909
    %1911 = vmatmul.f32.gmra.mxu0 %v728
    %v1912 = vpop.f32.mrf.mxu0
    %v1913 = vadd.f32 %v1518, %v1912
    %1914 = vmatmul.f32.gmra.mxu0 %v731
    %v1915 = vpop.f32.mrf.mxu0
    %v1916 = vadd.f32 %v1521, %v1915
    %1917 = vmatmul.f32.gmra.mxu0 %v734
    %v1918 = vpop.f32.mrf.mxu0
    %v1919 = vadd.f32 %v1524, %v1918
    %1920 = vmatmul.f32.gmra.mxu0 %v737
    %v1921 = vpop.f32.mrf.mxu0
    %v1922 = vadd.f32 %v1527, %v1921
    %1923 = vmatmul.f32.gmra.mxu0 %v740
    %v1924 = vpop.f32.mrf.mxu0
    %v1925 = vadd.f32 %v1530, %v1924
    %1926 = vmatmul.f32.gmra.mxu0 %v743
    %v1927 = vpop.f32.mrf.mxu0
    %v1928 = vadd.f32 %v1533, %v1927
    %1929 = vmatmul.f32.gmra.mxu0 %v746
    %v1930 = vpop.f32.mrf.mxu0
    %v1931 = vadd.f32 %v1536, %v1930
    %1932 = vmatmul.f32.gmra.mxu0 %v749
    %v1933 = vpop.f32.mrf.mxu0
    %v1934 = vadd.f32 %v1539, %v1933
    %1935 = vmatmul.f32.gmra.mxu0 %v752
    %v1936 = vpop.f32.mrf.mxu0
    %v1937 = vadd.f32 %v1542, %v1936
    %1938 = vmatmul.f32.gmra.mxu0 %v755
    %v1939 = vpop.f32.mrf.mxu0
    %v1940 = vadd.f32 %v1545, %v1939
    %1941 = vmatmul.f32.gmra.mxu0 %v758
    %v1942 = vpop.f32.mrf.mxu0
    %v1943 = vadd.f32 %v1548, %v1942
    %1944 = vmatmul.f32.gmra.mxu0 %v761
    %v1945 = vpop.f32.mrf.mxu0
    %v1946 = vadd.f32 %v1551, %v1945
    %1947 = vmatmul.f32.gmra.mxu0 %v764
    %v1948 = vpop.f32.mrf.mxu0
    %v1949 = vadd.f32 %v1554, %v1948
    %1950 = vmatmul.f32.gmra.mxu0 %v767
    %v1951 = vpop.f32.mrf.mxu0
    %v1952 = vadd.f32 %v1557, %v1951
    %1953 = vmatmul.f32.gmra.mxu0 %v770
    %v1954 = vpop.f32.mrf.mxu0
    %v1955 = vadd.f32 %v1560, %v1954
    %1956 = vmatmul.f32.gmra.mxu0 %v773
    %v1957 = vpop.f32.mrf.mxu0
    %v1958 = vadd.f32 %v1563, %v1957
    %1959 = vmatmul.f32.gmra.mxu0 %v776
    %v1960 = vpop.f32.mrf.mxu0
    %v1961 = vadd.f32 %v1566, %v1960
    %1962 = vmatmul.f32.gmra.mxu0 %v779
    %v1963 = vpop.f32.mrf.mxu0
    %v1964 = vadd.f32 %v1569, %v1963
    %1965 = vmatmul.f32.gmra.mxu0 %v782
    %v1966 = vpop.f32.mrf.mxu0
    %v1967 = vadd.f32 %v1572, %v1966
    %1968 = vmatmul.f32.gmra.mxu0 %v785
    %v1969 = vpop.f32.mrf.mxu0
    %v1970 = vadd.f32 %v1575, %v1969
    %1971 = vmatmul.f32.gmra.mxu0 %v788
    %v1972 = vpop.f32.mrf.mxu0
    %v1973 = vadd.f32 %v1578, %v1972
    %1974 = vmatmul.f32.gmra.mxu0 %v791
    %v1975 = vpop.f32.mrf.mxu0
    %v1976 = vadd.f32 %v1581, %v1975
    %1977 = vmatmul.f32.gmra.mxu0 %v794
    %v1978 = vpop.f32.mrf.mxu0
    %v1979 = vadd.f32 %v1584, %v1978
    %1980 = vmatmul.f32.gmra.mxu0 %v797
    %v1981 = vpop.f32.mrf.mxu0
    %v1982 = vadd.f32 %v1587, %v1981
    %1983 = vmatmul.f32.gmra.mxu0 %v800
    %v1984 = vpop.f32.mrf.mxu0
    %v1985 = vadd.f32 %v1590, %v1984
    %1986 = vmatmul.f32.gmra.mxu0 %v803
    %v1987 = vpop.f32.mrf.mxu0
    %v1988 = vadd.f32 %v1593, %v1987
    %1989 = vdwg.mxu0
    %v1990 = vmax.f32 %v1613, 0.0
    %v1991 = vmax.f32 %v1616, 0.0
    %v1992 = vmax.f32 %v1619, 0.0
    %v1993 = vmax.f32 %v1622, 0.0
    %v1994 = vmax.f32 %v1625, 0.0
    %v1995 = vmax.f32 %v1628, 0.0
    %v1996 = vmax.f32 %v1631, 0.0
    %v1997 = vmax.f32 %v1634, 0.0
    %v1998 = vmax.f32 %v1637, 0.0
    %v1999 = vmax.f32 %v1640, 0.0
    %v2000 = vmax.f32 %v1643, 0.0
    %v2001 = vmax.f32 %v1646, 0.0
    %v2002 = vmax.f32 %v1649, 0.0
    %v2003 = vmax.f32 %v1652, 0.0
    %v2004 = vmax.f32 %v1655, 0.0
    %v2005 = vmax.f32 %v1658, 0.0
    %v2006 = vmax.f32 %v1661, 0.0
    %v2007 = vmax.f32 %v1664, 0.0
    %v2008 = vmax.f32 %v1667, 0.0
    %v2009 = vmax.f32 %v1670, 0.0
    %v2010 = vmax.f32 %v1673, 0.0
    %v2011 = vmax.f32 %v1676, 0.0
    %v2012 = vmax.f32 %v1679, 0.0
    %v2013 = vmax.f32 %v1682, 0.0
    %v2014 = vmax.f32 %v1685, 0.0
    %v2015 = vmax.f32 %v1688, 0.0
    %v2016 = vmax.f32 %v1691, 0.0
    %v2017 = vmax.f32 %v1694, 0.0
    %v2018 = vmax.f32 %v1697, 0.0
    %v2019 = vmax.f32 %v1700, 0.0
    %v2020 = vmax.f32 %v1703, 0.0
    %v2021 = vmax.f32 %v1706, 0.0
    %v2022 = vmax.f32 %v1709, 0.0
    %v2023 = vmax.f32 %v1712, 0.0
    %v2024 = vmax.f32 %v1715, 0.0
    %v2025 = vmax.f32 %v1718, 0.0
    %v2026 = vmax.f32 %v1721, 0.0
    %v2027 = vmax.f32 %v1724, 0.0
    %v2028 = vmax.f32 %v1727, 0.0
    %v2029 = vmax.f32 %v1730, 0.0
    %v2030 = vmax.f32 %v1733, 0.0
    %v2031 = vmax.f32 %v1736, 0.0
    %v2032 = vmax.f32 %v1739, 0.0
    %v2033 = vmax.f32 %v1742, 0.0
    %v2034 = vmax.f32 %v1745, 0.0
    %v2035 = vmax.f32 %v1748, 0.0
    %v2036 = vmax.f32 %v1751, 0.0
    %v2037 = vmax.f32 %v1754, 0.0
    %v2038 = vmax.f32 %v1757, 0.0
    %v2039 = vmax.f32 %v1760, 0.0
    %v2040 = vmax.f32 %v1763, 0.0
    %v2041 = vmax.f32 %v1766, 0.0
    %v2042 = vmax.f32 %v1769, 0.0
    %v2043 = vmax.f32 %v1772, 0.0
    %v2044 = vmax.f32 %v1775, 0.0
    %v2045 = vmax.f32 %v1778, 0.0
    %v2046 = vmax.f32 %v1781, 0.0
    %v2047 = vmax.f32 %v1784, 0.0
    %v2048 = vmax.f32 %v1787, 0.0
    %v2049 = vmax.f32 %v1790, 0.0
    %v2050 = vmax.f32 %v1793, 0.0
    %v2051 = vmax.f32 %v1796, 0.0
    %v2052 = vmax.f32 %v1799, 0.0
    %v2053 = vmax.f32 %v1802, 0.0
    %v2054 = vmax.f32 %v1805, 0.0
    %v2055 = vmax.f32 %v1808, 0.0
    %v2056 = vmax.f32 %v1811, 0.0
    %v2057 = vmax.f32 %v1814, 0.0
    %v2058 = vmax.f32 %v1817, 0.0
    %v2059 = vmax.f32 %v1820, 0.0
    %v2060 = vmax.f32 %v1823, 0.0
    %v2061 = vmax.f32 %v1826, 0.0
    %v2062 = vmax.f32 %v1829, 0.0
    %v2063 = vmax.f32 %v1832, 0.0
    %v2064 = vmax.f32 %v1835, 0.0
    %v2065 = vmax.f32 %v1838, 0.0
    %v2066 = vmax.f32 %v1841, 0.0
    %v2067 = vmax.f32 %v1844, 0.0
    %v2068 = vmax.f32 %v1847, 0.0
    %v2069 = vmax.f32 %v1850, 0.0
    %v2070 = vmax.f32 %v1853, 0.0
    %v2071 = vmax.f32 %v1856, 0.0
    %v2072 = vmax.f32 %v1859, 0.0
    %v2073 = vmax.f32 %v1862, 0.0
    %v2074 = vmax.f32 %v1865, 0.0
    %v2075 = vmax.f32 %v1868, 0.0
    %v2076 = vmax.f32 %v1871, 0.0
    %v2077 = vmax.f32 %v1874, 0.0
    %v2078 = vmax.f32 %v1877, 0.0
    %v2079 = vmax.f32 %v1880, 0.0
    %v2080 = vmax.f32 %v1883, 0.0
    %v2081 = vmax.f32 %v1886, 0.0
    %v2082 = vmax.f32 %v1889, 0.0
    %v2083 = vmax.f32 %v1892, 0.0
    %v2084 = vmax.f32 %v1895, 0.0
    %v2085 = vmax.f32 %v1898, 0.0
    %v2086 = vmax.f32 %v1901, 0.0
    %v2087 = vmax.f32 %v1904, 0.0
    %v2088 = vmax.f32 %v1907, 0.0
    %v2089 = vmax.f32 %v1910, 0.0
    %v2090 = vmax.f32 %v1913, 0.0
    %v2091 = vmax.f32 %v1916, 0.0
    %v2092 = vmax.f32 %v1919, 0.0
    %v2093 = vmax.f32 %v1922, 0.0
    %v2094 = vmax.f32 %v1925, 0.0
    %v2095 = vmax.f32 %v1928, 0.0
    %v2096 = vmax.f32 %v1931, 0.0
    %v2097 = vmax.f32 %v1934, 0.0
    %v2098 = vmax.f32 %v1937, 0.0
    %v2099 = vmax.f32 %v1940, 0.0
    %v2100 = vmax.f32 %v1943, 0.0
    %v2101 = vmax.f32 %v1946, 0.0
    %v2102 = vmax.f32 %v1949, 0.0
    %v2103 = vmax.f32 %v1952, 0.0
    %v2104 = vmax.f32 %v1955, 0.0
    %v2105 = vmax.f32 %v1958, 0.0
    %v2106 = vmax.f32 %v1961, 0.0
    %v2107 = vmax.f32 %v1964, 0.0
    %v2108 = vmax.f32 %v1967, 0.0
    %v2109 = vmax.f32 %v1970, 0.0
    %v2110 = vmax.f32 %v1973, 0.0
    %v2111 = vmax.f32 %v1976, 0.0
    %v2112 = vmax.f32 %v1979, 0.0
    %v2113 = vmax.f32 %v1982, 0.0
    %v2114 = vmax.f32 %v1985, 0.0
    %v2115 = vmax.f32 %v1988, 0.0
    %v2116 = vld [vmem:[%s2] sm:$0xff]
    %v2117 = vld [vmem:[%s2 + $0x8] sm:$0xff]
    %v2118 = vld [vmem:[%s2 + $0x10] sm:$0xff]
    %v2119 = vld [vmem:[%s2 + $0x18] sm:$0xff]
    %v2120 = vld [vmem:[%s2 + $0x20] sm:$0xff]
    %v2121 = vld [vmem:[%s2 + $0x28] sm:$0xff]
    %v2122 = vld [vmem:[%s2 + $0x30] sm:$0xff]
    %v2123 = vld [vmem:[%s2 + $0x38] sm:$0xff]
    %v2124 = vld [vmem:[%s2 + $0x40] sm:$0xff]
    %v2125 = vld [vmem:[%s2 + $0x48] sm:$0xff]
    %v2126 = vld [vmem:[%s2 + $0x50] sm:$0xff]
    %v2127 = vld [vmem:[%s2 + $0x58] sm:$0xff]
    %v2128 = vld [vmem:[%s2 + $0x60] sm:$0xff]
    %v2129 = vld [vmem:[%s2 + $0x68] sm:$0xff]
    %v2130 = vld [vmem:[%s2 + $0x70] sm:$0xff]
    %v2131 = vld [vmem:[%s2 + $0x78] sm:$0xff]
    %v2132 = vld [vmem:[%s2 + $0x80] sm:$0xff]
    %v2133 = vld [vmem:[%s2 + $0x88] sm:$0xff]
    %v2134 = vld [vmem:[%s2 + $0x90] sm:$0xff]
    %v2135 = vld [vmem:[%s2 + $0x98] sm:$0xff]
    %v2136 = vld [vmem:[%s2 + $0xa0] sm:$0xff]
    %v2137 = vld [vmem:[%s2 + $0xa8] sm:$0xff]
    %v2138 = vld [vmem:[%s2 + $0xb0] sm:$0xff]
    %v2139 = vld [vmem:[%s2 + $0xb8] sm:$0xff]
    %vm2140 = vcmask 916480
    %v2142 = vsel %vm2140, %v2123, 0
    %v2145 = vsel %vm2140, %v2131, 0
    %v2148 = vsel %vm2140, %v2139, 0
    %2150 = vmatpush.msra.mxu0 %v2005
    %2151 = vmatpush.msra.mxu0 %v2004
    %2152 = vmatpush.msra.mxu0 %v2003
    %2153 = vmatpush.msra.mxu0 %v2002
    %2154 = vmatpush.msra.mxu0 %v2001
    %2155 = vmatpush.msra.mxu0 %v2000
    %2156 = vmatpush.msra.mxu0 %v1999
    %2157 = vmatpush.msra.mxu0 %v1998
    %2158 = vmatpush.msra.mxu0 %v1997
    %2159 = vmatpush.msra.mxu0 %v1996
    %2160 = vmatpush.msra.mxu0 %v1995
    %2161 = vmatpush.msra.mxu0 %v1994
    %2162 = vmatpush.msra.mxu0 %v1993
    %2163 = vmatpush.msra.mxu0 %v1992
    %2164 = vmatpush.msra.mxu0 %v1991
    %2165 = vmatpush.msra.mxu0 %v1990
    %2166 = vmatmul.f32.gmra.mxu0 %v2116
    %v2167 = vpop.f32.mrf.mxu0
    %v2168 = vadd.f32 0.0, %v2167
    %2169 = vmatmul.f32.gmra.mxu0 %v2124
    %v2170 = vpop.f32.mrf.mxu0
    %v2171 = vadd.f32 0.0, %v2170
    %2172 = vmatmul.f32.gmra.mxu0 %v2132
    %v2173 = vpop.f32.mrf.mxu0
    %v2174 = vadd.f32 0.0, %v2173
    %2175 = vdwg.mxu0
    %2176 = vmatpush.msra.mxu0 %v2021
    %2177 = vmatpush.msra.mxu0 %v2020
    %2178 = vmatpush.msra.mxu0 %v2019
    %2179 = vmatpush.msra.mxu0 %v2018
    %2180 = vmatpush.msra.mxu0 %v2017
    %2181 = vmatpush.msra.mxu0 %v2016
    %2182 = vmatpush.msra.mxu0 %v2015
    %2183 = vmatpush.msra.mxu0 %v2014
    %2184 = vmatpush.msra.mxu0 %v2013
    %2185 = vmatpush.msra.mxu0 %v2012
    %2186 = vmatpush.msra.mxu0 %v2011
    %2187 = vmatpush.msra.mxu0 %v2010
    %2188 = vmatpush.msra.mxu0 %v2009
    %2189 = vmatpush.msra.mxu0 %v2008
    %2190 = vmatpush.msra.mxu0 %v2007
    %2191 = vmatpush.msra.mxu0 %v2006
    %2192 = vmatmul.f32.gmra.mxu0 %v2117
    %v2193 = vpop.f32.mrf.mxu0
    %v2194 = vadd.f32 %v2168, %v2193
    %2195 = vmatmul.f32.gmra.mxu0 %v2125
    %v2196 = vpop.f32.mrf.mxu0
    %v2197 = vadd.f32 %v2171, %v2196
    %2198 = vmatmul.f32.gmra.mxu0 %v2133
    %v2199 = vpop.f32.mrf.mxu0
    %v2200 = vadd.f32 %v2174, %v2199
    %2201 = vdwg.mxu0
    %2202 = vmatpush.msra.mxu0 %v2037
    %2203 = vmatpush.msra.mxu0 %v2036
    %2204 = vmatpush.msra.mxu0 %v2035
    %2205 = vmatpush.msra.mxu0 %v2034
    %2206 = vmatpush.msra.mxu0 %v2033
    %2207 = vmatpush.msra.mxu0 %v2032
    %2208 = vmatpush.msra.mxu0 %v2031
    %2209 = vmatpush.msra.mxu0 %v2030
    %2210 = vmatpush.msra.mxu0 %v2029
    %2211 = vmatpush.msra.mxu0 %v2028
    %2212 = vmatpush.msra.mxu0 %v2027
    %2213 = vmatpush.msra.mxu0 %v2026
    %2214 = vmatpush.msra.mxu0 %v2025
    %2215 = vmatpush.msra.mxu0 %v2024
    %2216 = vmatpush.msra.mxu0 %v2023
    %2217 = vmatpush.msra.mxu0 %v2022
    %2218 = vmatmul.f32.gmra.mxu0 %v2118
    %v2219 = vpop.f32.mrf.mxu0
    %v2220 = vadd.f32 %v2194, %v2219
    %2221 = vmatmul.f32.gmra.mxu0 %v2126
    %v2222 = vpop.f32.mrf.mxu0
    %v2223 = vadd.f32 %v2197, %v2222
    %2224 = vmatmul.f32.gmra.mxu0 %v2134
    %v2225 = vpop.f32.mrf.mxu0
    %v2226 = vadd.f32 %v2200, %v2225
    %2227 = vdwg.mxu0
    %2228 = vmatpush.msra.mxu0 %v2053
    %2229 = vmatpush.msra.mxu0 %v2052
    %2230 = vmatpush.msra.mxu0 %v2051
    %2231 = vmatpush.msra.mxu0 %v2050
    %2232 = vmatpush.msra.mxu0 %v2049
    %2233 = vmatpush.msra.mxu0 %v2048
    %2234 = vmatpush.msra.mxu0 %v2047
    %2235 = vmatpush.msra.mxu0 %v2046
    %2236 = vmatpush.msra.mxu0 %v2045
    %2237 = vmatpush.msra.mxu0 %v2044
    %2238 = vmatpush.msra.mxu0 %v2043
    %2239 = vmatpush.msra.mxu0 %v2042
    %2240 = vmatpush.msra.mxu0 %v2041
    %2241 = vmatpush.msra.mxu0 %v2040
    %2242 = vmatpush.msra.mxu0 %v2039
    %2243 = vmatpush.msra.mxu0 %v2038
    %2244 = vmatmul.f32.gmra.mxu0 %v2119
    %v2245 = vpop.f32.mrf.mxu0
    %v2246 = vadd.f32 %v2220, %v2245
    %2247 = vmatmul.f32.gmra.mxu0 %v2127
    %v2248 = vpop.f32.mrf.mxu0
    %v2249 = vadd.f32 %v2223, %v2248
    %2250 = vmatmul.f32.gmra.mxu0 %v2135
    %v2251 = vpop.f32.mrf.mxu0
    %v2252 = vadd.f32 %v2226, %v2251
    %2253 = vdwg.mxu0
    %2254 = vmatpush.msra.mxu0 %v2069
    %2255 = vmatpush.msra.mxu0 %v2068
    %2256 = vmatpush.msra.mxu0 %v2067
    %2257 = vmatpush.msra.mxu0 %v2066
    %2258 = vmatpush.msra.mxu0 %v2065
    %2259 = vmatpush.msra.mxu0 %v2064
    %2260 = vmatpush.msra.mxu0 %v2063
    %2261 = vmatpush.msra.mxu0 %v2062
    %2262 = vmatpush.msra.mxu0 %v2061
    %2263 = vmatpush.msra.mxu0 %v2060
    %2264 = vmatpush.msra.mxu0 %v2059
    %2265 = vmatpush.msra.mxu0 %v2058
    %2266 = vmatpush.msra.mxu0 %v2057
    %2267 = vmatpush.msra.mxu0 %v2056
    %2268 = vmatpush.msra.mxu0 %v2055
    %2269 = vmatpush.msra.mxu0 %v2054
    %2270 = vmatmul.f32.gmra.mxu0 %v2120
    %v2271 = vpop.f32.mrf.mxu0
    %v2272 = vadd.f32 %v2246, %v2271
    %2273 = vmatmul.f32.gmra.mxu0 %v2128
    %v2274 = vpop.f32.mrf.mxu0
    %v2275 = vadd.f32 %v2249, %v2274
    %2276 = vmatmul.f32.gmra.mxu0 %v2136
    %v2277 = vpop.f32.mrf.mxu0
    %v2278 = vadd.f32 %v2252, %v2277
    %2279 = vdwg.mxu0
    %2280 = vmatpush.msra.mxu0 %v2085
    %2281 = vmatpush.msra.mxu0 %v2084
    %2282 = vmatpush.msra.mxu0 %v2083
    %2283 = vmatpush.msra.mxu0 %v2082
    %2284 = vmatpush.msra.mxu0 %v2081
    %2285 = vmatpush.msra.mxu0 %v2080
    %2286 = vmatpush.msra.mxu0 %v2079
    %2287 = vmatpush.msra.mxu0 %v2078
    %2288 = vmatpush.msra.mxu0 %v2077
    %2289 = vmatpush.msra.mxu0 %v2076
    %2290 = vmatpush.msra.mxu0 %v2075
    %2291 = vmatpush.msra.mxu0 %v2074
    %2292 = vmatpush.msra.mxu0 %v2073
    %2293 = vmatpush.msra.mxu0 %v2072
    %2294 = vmatpush.msra.mxu0 %v2071
    %2295 = vmatpush.msra.mxu0 %v2070
    %2296 = vmatmul.f32.gmra.mxu0 %v2121
    %v2297 = vpop.f32.mrf.mxu0
    %v2298 = vadd.f32 %v2272, %v2297
    %2299 = vmatmul.f32.gmra.mxu0 %v2129
    %v2300 = vpop.f32.mrf.mxu0
    %v2301 = vadd.f32 %v2275, %v2300
    %2302 = vmatmul.f32.gmra.mxu0 %v2137
    %v2303 = vpop.f32.mrf.mxu0
    %v2304 = vadd.f32 %v2278, %v2303
    %2305 = vdwg.mxu0
    %2306 = vmatpush.msra.mxu0 %v2101
    %2307 = vmatpush.msra.mxu0 %v2100
    %2308 = vmatpush.msra.mxu0 %v2099
    %2309 = vmatpush.msra.mxu0 %v2098
    %2310 = vmatpush.msra.mxu0 %v2097
    %2311 = vmatpush.msra.mxu0 %v2096
    %2312 = vmatpush.msra.mxu0 %v2095
    %2313 = vmatpush.msra.mxu0 %v2094
    %2314 = vmatpush.msra.mxu0 %v2093
    %2315 = vmatpush.msra.mxu0 %v2092
    %2316 = vmatpush.msra.mxu0 %v2091
    %2317 = vmatpush.msra.mxu0 %v2090
    %2318 = vmatpush.msra.mxu0 %v2089
    %2319 = vmatpush.msra.mxu0 %v2088
    %2320 = vmatpush.msra.mxu0 %v2087
    %2321 = vmatpush.msra.mxu0 %v2086
    %2322 = vmatmul.f32.gmra.mxu0 %v2122
    %v2323 = vpop.f32.mrf.mxu0
    %v2324 = vadd.f32 %v2298, %v2323
    %2325 = vmatmul.f32.gmra.mxu0 %v2130
    %v2326 = vpop.f32.mrf.mxu0
    %v2327 = vadd.f32 %v2301, %v2326
    %2328 = vmatmul.f32.gmra.mxu0 %v2138
    %v2329 = vpop.f32.mrf.mxu0
    %v2330 = vadd.f32 %v2304, %v2329
    %2331 = vdwg.mxu0
    %2332 = vmatpush.msra.mxu0 0.0
    %2333 = vmatpush.msra.mxu0 0.0
    %2334 = vmatpush.msra.mxu0 %v2115
    %2335 = vmatpush.msra.mxu0 %v2114
    %2336 = vmatpush.msra.mxu0 %v2113
    %2337 = vmatpush.msra.mxu0 %v2112
    %2338 = vmatpush.msra.mxu0 %v2111
    %2339 = vmatpush.msra.mxu0 %v2110
    %2340 = vmatpush.msra.mxu0 %v2109
    %2341 = vmatpush.msra.mxu0 %v2108
    %2342 = vmatpush.msra.mxu0 %v2107
    %2343 = vmatpush.msra.mxu0 %v2106
    %2344 = vmatpush.msra.mxu0 %v2105
    %2345 = vmatpush.msra.mxu0 %v2104
    %2346 = vmatpush.msra.mxu0 %v2103
    %2347 = vmatpush.msra.mxu0 %v2102
    %2348 = vmatmul.f32.gmra.mxu0 %v2142
    %v2349 = vpop.f32.mrf.mxu0
    %v2350 = vadd.f32 %v2324, %v2349
    %2351 = vmatmul.f32.gmra.mxu0 %v2145
    %v2352 = vpop.f32.mrf.mxu0
    %v2353 = vadd.f32 %v2327, %v2352
    %2354 = vmatmul.f32.gmra.mxu0 %v2148
    %v2355 = vpop.f32.mrf.mxu0
    %v2356 = vadd.f32 %v2330, %v2355
    %2357 = vdwg.mxu0
    %2358 = vst [vmem:[#allocation2] sm:$0xff] %v2350
    %2359 = vst [vmem:[#allocation2 + $0x8] sm:$0xff] %v2353
    %2360 = vst [vmem:[#allocation2 + $0x10] sm:$0xff] %v2356
    // Predicated region
    $region14: #{tpu_custom_call.1} parent=1 // pred_check
      _
    $region15: #{tpu_custom_call.1} parent=1 // pred_check_branch
      %2362 = sbr.rel (0) target = $region17
    $region16: #{tpu_custom_call.1} parent=1 // pred_region
      %2364 = vsyncadd [#allocation3], 0
      %s2365 = sshll.u32 [#allocation2], 4
      %s2366 = int_to_ptr.vmem [resolvable:$true] %s2365
      %s2367 = sshll.u32 %s3, 4
      %s2368 = int_to_ptr.hbm [resolvable:$true] %s2367
      %2373 = dma.vmem_to_hbm [thread:$0]  %s2366, 384, %s2368, [#allocation3], 128, 128, 8
    $region17: #{tpu_custom_call.1} parent=1 // pred_fallthru
      _
    // Predicated region
    $region18: #{tpu_custom_call.1} parent=1 // pred_check
      _
    $region19: #{tpu_custom_call.1} parent=1 // pred_check_branch
      %2375 = sbr.rel (0) target = $region21
    $region20: #{tpu_custom_call.1} parent=1 // pred_region
      %2377 = dma.done [#allocation3], 384
    $region21: #{tpu_custom_call.1} parent=1 // pred_fallthru
      _
    %2378 = vsyncpa [#allocation3], 1

</llo_original>
